<compile_context>
chip_gen: v7x
topology: tpu7x:2x2x1
jax: 0.10.0
libtpu: 0.0.40
codegen_flags: <defaults>
</compile_context>

<pallas_src>
import functools

import jax
import jax.numpy as jnp
from jax.experimental import pallas as pl
from jax.experimental.pallas import tpu as pltpu

NEG_BIG = -1e30
VMEM_LIMIT_BYTES = 32 * 1024 * 1024  # fine for tile=256 on v5e/v6e/v7x (v7x has 64 MiB physical)


def _round_up(x, m):
    return (x + m - 1) // m * m


def _choose_f_pad(f_out, heads):
    """Smallest per-head width >= f_out such that heads * f_pad is a multiple of 128."""
    step = 128 // heads if 128 % heads == 0 else 128
    return _round_up(max(f_out, 1), step)


def _pick_tile_row(n_pad):
    for t in (1024, 512, 256, 128):
        if n_pad % t == 0:
            return t
    return n_pad


# ---------------------------------------------------------------------------
# Kernel (a): per-node projection  h = x @ W,  [alpha_src | alpha_dst] = h @ A
# ---------------------------------------------------------------------------
def _proj_kernel(x_ref, w_ref, a_ref, h_ref, alpha_ref, *, apply_elu):
    x = x_ref[...].astype(jnp.float32)
    if apply_elu:
        # F.elu between gat1 and gat2, fused into this layer's input.
        x = jnp.where(x > 0, x, jnp.exp(x) - 1.0)
    h = jnp.dot(x, w_ref[...], preferred_element_type=jnp.float32)
    h_ref[...] = h.astype(h_ref.dtype)          # bf16 store by default
    # All per-head attention scores with one MXU matmul, from the f32 h (accuracy).
    alpha_ref[...] = jnp.dot(h, a_ref[...], preferred_element_type=jnp.float32)


# ---------------------------------------------------------------------------
# Kernel (b): attention + aggregation with online softmax over src tiles
# ---------------------------------------------------------------------------
def _attn_kernel(tmask_ref, adst_ref, asrcT_ref, h_ref, adj_ref, bias_ref,
                 out_ref, m_sc, l_sc, *, heads, f_pad, negative_slope, matmul_dtype):
    i = pl.program_id(0)
    k = pl.program_id(1)

    @pl.when(k == 0)
    def _init():
        m_sc[...] = jnp.full_like(m_sc, NEG_BIG)
        l_sc[...] = jnp.zeros_like(l_sc)
        out_ref[...] = jnp.zeros_like(out_ref)   # out block is the resident accumulator

    # Block-sparse skip: whole compute body gated on the prefetched tile-mask.
    # TODO(synk): a block-CSR index_map (data-dependent src-tile list per dst tile)
    # would also skip the adj/h DMA for empty tiles, not just the compute.
    @pl.when(tmask_ref[i, k] != 0)
    def _compute():
        mask = adj_ref[...] != 0                 # int8 tile -> bool, no f32 convert
        for hd in range(heads):                  # heads is small & static
            sl = slice(hd * f_pad, (hd + 1) * f_pad)
            # e[i, j] = LeakyReLU(alpha_dst[i] + alpha_src[j]); masked -> -1e30.
            e = adst_ref[:, hd:hd + 1] + asrcT_ref[hd:hd + 1, :]
            e = jnp.where(mask, jnp.maximum(e, negative_slope * e), NEG_BIG)

            m_prev = m_sc[:, hd:hd + 1]                                  # (TILE_DST, 1)
            m_new = jnp.maximum(m_prev, jnp.max(e, axis=1, keepdims=True))
            corr = jnp.exp(m_prev - m_new)
            p = jnp.exp(e - m_new)               # masked entries underflow to exactly 0

            l_sc[:, hd:hd + 1] = corr * l_sc[:, hd:hd + 1] + jnp.sum(p, axis=1, keepdims=True)
            m_sc[:, hd:hd + 1] = m_new
            # Accumulate directly into the resident output block (f32 accumulation).
            out_ref[:, sl] = corr * out_ref[:, sl] + jnp.dot(
                p.astype(matmul_dtype), h_ref[:, sl],
                preferred_element_type=jnp.float32)

    @pl.when(k == pl.num_programs(1) - 1)
    def _finalize():
        for hd in range(heads):
            sl = slice(hd * f_pad, (hd + 1) * f_pad)
            # Deferred normalization: one reciprocal of the (TILE_DST, 1) denominator.
            inv = pl.reciprocal(jnp.maximum(l_sc[:, hd:hd + 1], 1e-30), approx=True)
            out_ref[:, sl] = (out_ref[:, sl] * inv + bias_ref[:, sl]).astype(out_ref.dtype)


# ---------------------------------------------------------------------------
# Wrappers
# ---------------------------------------------------------------------------
def gat_conv(x, adj_i8, params, *, heads, f_out, apply_elu_to_input=False,
             tile=256, compute_dtype=jnp.bfloat16, negative_slope=0.2):
    """One GATConv(concat=True) layer as two tiled Pallas calls.

    x:      (n_pad, f_in) float32, n_pad a multiple of `tile`.
    adj_i8: (n_pad, n_pad) int8, adj[i, j] = 1 iff edge j -> i (self-loops included).
    params: (w (f_in, heads*f_out), a_src (heads, f_out), a_dst (heads, f_out),
             bias (1, heads*f_out)).
    Returns (n_pad, heads*f_pad) float32; head hd lives in columns
    [hd*f_pad, hd*f_pad + f_out) with zero padding elsewhere.
    compute_dtype: storage dtype of h and input dtype of the p@h matmul (bf16 default;
    f32 accumulation via preferred_element_type either way).
    """
    n_pad, f_in = x.shape
    assert n_pad % tile == 0
    w, a_src, a_dst, bias = params
    f_pad = _choose_f_pad(f_out, heads)
    c_pad = heads * f_pad
    tile_row = _pick_tile_row(n_pad)

    # ---- pad parameters to the lane-dense per-head layout (wrapper-side, once) ----
    w_pad = jnp.zeros((f_in, c_pad), jnp.float32)
    a_mat = jnp.zeros((c_pad, 2 * heads), jnp.float32)
    bias_pad = jnp.zeros((1, c_pad), jnp.float32)
    for hd in range(heads):
        w_pad = w_pad.at[:, hd * f_pad:hd * f_pad + f_out].set(
            w[:, hd * f_out:(hd + 1) * f_out])
        a_mat = a_mat.at[hd * f_pad:hd * f_pad + f_out, hd].set(a_src[hd])
        a_mat = a_mat.at[hd * f_pad:hd * f_pad + f_out, heads + hd].set(a_dst[hd])
        bias_pad = bias_pad.at[:, hd * f_pad:hd * f_pad + f_out].set(
            bias[:, hd * f_out:(hd + 1) * f_out])

    # ---- (a) projection: tiled over node rows --------------------------------
    h, alpha = pl.pallas_call(
        functools.partial(_proj_kernel, apply_elu=apply_elu_to_input),
        grid=(n_pad // tile_row,),
        in_specs=[
            pl.BlockSpec((tile_row, f_in), lambda i: (i, 0)),
            pl.BlockSpec((f_in, c_pad), lambda i: (0, 0)),
            pl.BlockSpec((c_pad, 2 * heads), lambda i: (0, 0)),
        ],
        out_specs=[
            pl.BlockSpec((tile_row, c_pad), lambda i: (i, 0)),
            pl.BlockSpec((tile_row, 2 * heads), lambda i: (i, 0)),
        ],
        out_shape=[
            jax.ShapeDtypeStruct((n_pad, c_pad), compute_dtype),       # h, bf16 by default
            jax.ShapeDtypeStruct((n_pad, 2 * heads), jnp.float32),     # attention scores
        ],
        compiler_params=pltpu.CompilerParams(
            dimension_semantics=("parallel",),
            vmem_limit_bytes=VMEM_LIMIT_BYTES),
    )(x, w_pad, a_mat)

    alpha_src_t = alpha[:, :heads].T        # (heads, n_pad): src scores on the lane axis
    alpha_dst = alpha[:, heads:]            # (n_pad, heads)

    # Per-(dst_tile, src_tile) "has edges" table for the block-sparse compute skip.
    nd = n_pad // tile
    ns = n_pad // tile
    tmask = (adj_i8.reshape(nd, tile, ns, tile) != 0).any(axis=(1, 3)).astype(jnp.int32)

    # ---- (b) attention + aggregation: (dst, src) grid, online softmax --------
    out = pl.pallas_call(
        functools.partial(_attn_kernel, heads=heads, f_pad=f_pad,
                          negative_slope=negative_slope, matmul_dtype=compute_dtype),
        grid_spec=pltpu.PrefetchScalarGridSpec(
            num_scalar_prefetch=1,
            grid=(nd, ns),
            in_specs=[
                pl.BlockSpec((tile, heads), lambda i, k, tm: (i, 0)),     # alpha_dst
                pl.BlockSpec((heads, tile), lambda i, k, tm: (0, k)),     # alpha_src^T
                pl.BlockSpec((tile, c_pad), lambda i, k, tm: (k, 0)),     # h (by src node)
                pl.BlockSpec((tile, tile), lambda i, k, tm: (i, k)),      # adj, int8
                pl.BlockSpec((1, c_pad), lambda i, k, tm: (0, 0)),        # bias
            ],
            out_specs=pl.BlockSpec((tile, c_pad), lambda i, k, tm: (i, 0)),
            scratch_shapes=[
                pltpu.VMEM((tile, heads), jnp.float32),   # running max, heads packed on lanes
                pltpu.VMEM((tile, heads), jnp.float32),   # running denominator
            ]),
        out_shape=jax.ShapeDtypeStruct((n_pad, c_pad), jnp.float32),
        compiler_params=pltpu.CompilerParams(
            dimension_semantics=("parallel", "arbitrary"),
            vmem_limit_bytes=VMEM_LIMIT_BYTES),
    )(tmask, alpha_dst, alpha_src_t, h, adj_i8, bias_pad)
    return out


def gat_forward(x, adj_i8, params1, params2, *, hidden, heads, m_y,
                tile=256, compute_dtype=jnp.bfloat16):
    """GAT.forward: gat2(dropout(elu(gat1(x)))) with dropout = identity (inference).

    Isolated nodes rely on caller-added self-loops (PyG add_self_loops default);
    padding rows are masked as sources and sliced off.
    # TODO(synk): F.dropout(p=0.5, training=True) omitted — identity in inference mode.
    # TODO(synk): on v7x an fp8-e4m3 h / p path would double MXU rate again; not enabled.
    """
    n = x.shape[0]
    n_pad = _round_up(n, tile)
    x_p = jnp.pad(x, ((0, n_pad - n), (0, 0)))
    adj_p = jnp.pad(adj_i8, ((0, n_pad - n), (0, n_pad - n)))

    out1 = gat_conv(x_p, adj_p, params1, heads=heads, f_out=hidden,
                    tile=tile, compute_dtype=compute_dtype)

    # Layer 2 consumes layer 1's lane-padded output directly: expand W2's rows to the
    # padded per-head layout (zero rows at padding positions). ELU(0) = 0 and the zero
    # rows keep the padding columns inert, so no gather/compaction HBM round trip.
    f_pad1 = _choose_f_pad(hidden, heads)
    w2, a2_src, a2_dst, b2 = params2
    w2_exp = jnp.zeros((heads * f_pad1, w2.shape[1]), jnp.float32)
    for hd in range(heads):
        w2_exp = w2_exp.at[hd * f_pad1:hd * f_pad1 + hidden, :].set(
            w2[hd * hidden:(hd + 1) * hidden, :])

    out2 = gat_conv(out1, adj_p, (w2_exp, a2_src, a2_dst, b2), heads=1, f_out=m_y,
                    apply_elu_to_input=True,   # fuses the F.elu between the layers
                    tile=tile, compute_dtype=compute_dtype)
    return out2[:n, :m_y]


# ---------------------------------------------------------------------------
# Parameter init + pure-JAX reference (correctness check)
# ---------------------------------------------------------------------------
def _glorot(key, shape):
    fan_in, fan_out = shape[0], shape[-1]
    limit = (6.0 / (fan_in + fan_out)) ** 0.5
    return jax.random.uniform(key, shape, jnp.float32, -limit, limit)


def init_gat_params(key, m, m_y, hidden, heads):
    k = jax.random.split(key, 6)
    w1 = _glorot(k[0], (m, heads * hidden))
    a1_src = _glorot(k[1], (heads, hidden))
    a1_dst = _glorot(k[2], (heads, hidden))
    b1 = jnp.zeros((1, heads * hidden), jnp.float32)
    w2 = _glorot(k[3], (heads * hidden, m_y))
    a2_src = _glorot(k[4], (1, m_y))
    a2_dst = _glorot(k[5], (1, m_y))
    b2 = jnp.zeros((1, m_y), jnp.float32)
    return (w1, a1_src, a1_dst, b1), (w2, a2_src, a2_dst, b2)


def _gat_conv_ref(x, adj_f, params, negative_slope=0.2):
    w, a_src, a_dst, bias = params
    heads, f_out = a_src.shape
    h = x @ w
    outs = []
    for hd in range(heads):
        hh = h[:, hd * f_out:(hd + 1) * f_out]
        alpha_s = hh @ a_src[hd]
        alpha_d = hh @ a_dst[hd]
        e = alpha_d[:, None] + alpha_s[None, :]
        e = jnp.where(e > 0, e, negative_slope * e)
        e = jnp.where(adj_f > 0, e, -jnp.inf)
        attn = jax.nn.softmax(e, axis=1)
        outs.append(attn @ hh)
    out = jnp.concatenate(outs, axis=1) if heads > 1 else outs[0]
    return out + bias


def _gat_ref(x, adj_f, p1, p2):
    o = _gat_conv_ref(x, adj_f, p1)
    o = jax.nn.elu(o)
    return _gat_conv_ref(o, adj_f, p2)


if __name__ == "__main__":
    # N=900 nodes -> padded to 1024 -> a 4x4 attention tile grid at tile=256, exercising
    # the online-softmax accumulation and the block-sparse tile skip.
    N, m, m_y, hidden, heads = 900, 8, 4, 16, 2

    key = jax.random.PRNGKey(0)
    kx, kp = jax.random.split(key)
    x = jax.random.normal(kx, (N, m), jnp.float32)

    # Deterministic ring graph (both directions) plus long-range chords.
    src = jnp.arange(N, dtype=jnp.int32)
    nxt = (src + 1) % N
    chord = (src + 7) % N
    edge_src = jnp.concatenate([src, nxt, src, chord])
    edge_dst = jnp.concatenate([nxt, src, chord, src])

    # Densify edge_index into an int8 (N_dst, N_src) mask; add self-loops (PyG default).
    adj = jnp.zeros((N, N), jnp.int8)
    adj = adj.at[edge_dst, edge_src].set(1)
    adj = adj.at[jnp.arange(N), jnp.arange(N)].set(1)

    params1, params2 = init_gat_params(kp, m, m_y, hidden, heads)
    ref = _gat_ref(x, adj.astype(jnp.float32), params1, params2)

    # Exact-path check (f32 h / f32 aggregation matmul).
    out_f32 = gat_forward(x, adj, params1, params2, hidden=hidden, heads=heads,
                          m_y=m_y, compute_dtype=jnp.float32)
    out_f32 = jax.block_until_ready(out_f32)
    assert out_f32.shape == (N, m_y) and out_f32.dtype == jnp.float32
    err32 = float(jnp.max(jnp.abs(out_f32 - ref)))
    assert err32 < 3e-2, f"f32 path max abs err = {err32}"

    # Default fast path (bf16 h + bf16 p@h on the MXU, f32 accumulation): looser
    # tolerance covers the bf16 quantization of h/p through two layers.
    out_bf16 = gat_forward(x, adj, params1, params2, hidden=hidden, heads=heads, m_y=m_y)
    out_bf16 = jax.block_until_ready(out_bf16)
    assert out_bf16.shape == (N, m_y) and out_bf16.dtype == jnp.float32
    err16 = float(jnp.max(jnp.abs(out_bf16 - ref)))
    assert err16 < 1e-1, f"bf16 path max abs err = {err16}"

    print("KERNEL_OK")
</pallas_src>

<mosaic_0001>
module attributes {stable_mosaic.version = 11 : i64} {
  func.func @_proj_kernel(%arg0: i32, %arg1: memref<1024x8xf32, #tpu.memory_space<vmem>>, %arg2: memref<8x128xf32, #tpu.memory_space<vmem>>, %arg3: memref<128x4xf32, #tpu.memory_space<vmem>>, %arg4: memref<1024x128xf32, #tpu.memory_space<vmem>>, %arg5: memref<1024x4xf32, #tpu.memory_space<vmem>>) attributes {dimension_semantics = [#tpu.dimension_semantics<parallel>], iteration_bounds = array<i64: 1>, scalar_prefetch = 0 : i64, scratch_operands = 0 : i64, tpu.core_type = #tpu.core_type<tc>, window_params = [{transform_indices = @transform_0, window_bounds = array<i64: 1024, 8>}, {pipeline_mode = #tpu.pipeline_mode<synchronous>, transform_indices = @transform_1, window_bounds = array<i64: 8, 128>}, {pipeline_mode = #tpu.pipeline_mode<synchronous>, transform_indices = @transform_2, window_bounds = array<i64: 128, 4>}, {transform_indices = @transform_3, window_bounds = array<i64: 1024, 128>}, {transform_indices = @transform_4, window_bounds = array<i64: 1024, 4>}]} {
    %c0 = arith.constant 0 : index
    %c0_0 = arith.constant 0 : index
    %0 = vector.load %arg1[%c0, %c0_0] : memref<1024x8xf32, #tpu.memory_space<vmem>>, vector<1024x8xf32>
    %c0_1 = arith.constant 0 : index
    %c0_2 = arith.constant 0 : index
    %1 = vector.load %arg2[%c0_1, %c0_2] : memref<8x128xf32, #tpu.memory_space<vmem>>, vector<8x128xf32>
    %cst = arith.constant dense<0.000000e+00> : vector<1024x128xf32>
    %2 = tpu.matmul %0, %1, %cst {dimension_numbers = #tpu.dot_dimension_numbers<[1], [0], [0], [1], [0, 0, 1, 1], [], []>} : vector<1024x8xf32>, vector<8x128xf32>, vector<1024x128xf32> -> vector<1024x128xf32>
    %c0_3 = arith.constant 0 : index
    %c0_4 = arith.constant 0 : index
    %3 = vector.load %arg4[%c0_3, %c0_4] : memref<1024x128xf32, #tpu.memory_space<vmem>>, vector<1024x128xf32>
    tpu.vector_store %arg4[%c0_3, %c0_4], %2 {strides = array<i32>} : memref<1024x128xf32, #tpu.memory_space<vmem>>, vector<1024x128xf32>,
    %c0_5 = arith.constant 0 : index
    %c0_6 = arith.constant 0 : index
    %4 = vector.load %arg3[%c0_5, %c0_6] : memref<128x4xf32, #tpu.memory_space<vmem>>, vector<128x4xf32>
    %cst_7 = arith.constant dense<0.000000e+00> : vector<1024x4xf32>
    %5 = tpu.matmul %2, %4, %cst_7 {dimension_numbers = #tpu.dot_dimension_numbers<[1], [0], [0], [1], [0, 0, 1, 1], [], []>} : vector<1024x128xf32>, vector<128x4xf32>, vector<1024x4xf32> -> vector<1024x4xf32>
    %c0_8 = arith.constant 0 : index
    %c0_9 = arith.constant 0 : index
    %6 = vector.load %arg5[%c0_8, %c0_9] : memref<1024x4xf32, #tpu.memory_space<vmem>>, vector<1024x4xf32>
    tpu.vector_store %arg5[%c0_8, %c0_9], %5 {strides = array<i32>} : memref<1024x4xf32, #tpu.memory_space<vmem>>, vector<1024x4xf32>,
    return
  }
  func.func @transform_0(%arg0: i32) -> (i32, i32) {
    %c0_i32 = arith.constant 0 : i32
    %c0_i32_0 = arith.constant 0 : i32
    return %arg0, %c0_i32 : i32, i32
  }
  func.func @transform_1(%arg0: i32) -> (i32, i32) {
    %c0_i32 = arith.constant 0 : i32
    %c0_i32_0 = arith.constant 0 : i32
    %c0_i32_1 = arith.constant 0 : i32
    return %c0_i32, %c0_i32_0 : i32, i32
  }
  func.func @transform_2(%arg0: i32) -> (i32, i32) {
    %c0_i32 = arith.constant 0 : i32
    %c0_i32_0 = arith.constant 0 : i32
    %c0_i32_1 = arith.constant 0 : i32
    return %c0_i32, %c0_i32_0 : i32, i32
  }
  func.func @transform_3(%arg0: i32) -> (i32, i32) {
    %c0_i32 = arith.constant 0 : i32
    %c0_i32_0 = arith.constant 0 : i32
    return %arg0, %c0_i32 : i32, i32
  }
  func.func @transform_4(%arg0: i32) -> (i32, i32) {
    %c0_i32 = arith.constant 0 : i32
    %c0_i32_0 = arith.constant 0 : i32
    return %arg0, %c0_i32 : i32, i32
  }
}

</mosaic_0001>

<llo_original>
// kernel: tpu_custom_call.1
$region0: #{tpu_custom_call.1}
  #allocation0 [shape = 'u32[]', space=smem, size = 0x4, offset = 0x4, fixed_abs, tag = 'smem constant byte address 0x4 - core index']
  #allocation1 [shape = 'u32[144,128]{1,0:T(1,128)}', space=vmem, size = 0x12000, scoped, tag = 'internal scratch']
  %s0 = inlined_call_operand.vmem [shape: f32[1024,8], index: 0, kind: input, shape index: {}]
  %s1 = inlined_call_operand.vmem [shape: f32[8,128], index: 1, kind: input, shape index: {}]
  %s2 = inlined_call_operand.vmem [shape: f32[128,4], index: 2, kind: input, shape index: {}]
  %s3 = inlined_call_operand.hbm [shape: f32[1024,128], index: 3, kind: output, shape index: {0}]
  %s4 = inlined_call_operand.vmem [shape: f32[1024,4], index: 4, kind: output, shape index: {1}]
  %5 = xla_tuple %s3, %s4
  %s6 = sld [smem:[#allocation0]]
  $region30: #{tpu_custom_call.1} parent=0
    _
  %s8 = ssub.s32 1, %s6
  %s9 = scalar_select 0, %s8, %s6
  $region1: #{tpu_custom_call.1} parent=0
    #allocation2 [shape = 'u8[524288]{0}', space=vmem, size = 0x80000, scoped, tag = 'output window, operand 0, single buffered']
    #allocation3 [shape = 's32[1]{0}', space=sflag, size = 0x4, scoped, tag = 'scoped memory for tpu_custom_call.1']
    %10 = vsyncpa [#allocation3], 0
    // Predicated region
    $region2: #{tpu_custom_call.1} parent=1 // pred_check
      _
    $region3: #{tpu_custom_call.1} parent=1 // pred_check_branch
      %12 = sbr.rel (0) target = $region5
    $region4: #{tpu_custom_call.1} parent=1 // pred_region
      _
    $region5: #{tpu_custom_call.1} parent=1 // pred_fallthru
      _
    // Predicated region
    $region6: #{tpu_custom_call.1} parent=1 // pred_check
      _
    $region7: #{tpu_custom_call.1} parent=1 // pred_check_branch
      %14 = sbr.rel (0) target = $region9
    $region8: #{tpu_custom_call.1} parent=1 // pred_region
      _
    $region9: #{tpu_custom_call.1} parent=1 // pred_fallthru
      _
    // Predicated region
    $region10: #{tpu_custom_call.1} parent=1 // pred_check
      _
    $region11: #{tpu_custom_call.1} parent=1 // pred_check_branch
      %16 = sbr.rel (0) target = $region13
    $region12: #{tpu_custom_call.1} parent=1 // pred_region
      _
    $region13: #{tpu_custom_call.1} parent=1 // pred_fallthru
      _
    %v17 = vld [vmem:[%s0] sm:$0xff]
    %v18 = vld [vmem:[%s0 + $0x8] sm:$0xff]
    %v19 = vld [vmem:[%s0 + $0x10] sm:$0xff]
    %v20 = vld [vmem:[%s0 + $0x18] sm:$0xff]
    %v21 = vld [vmem:[%s0 + $0x20] sm:$0xff]
    %v22 = vld [vmem:[%s0 + $0x28] sm:$0xff]
    %v23 = vld [vmem:[%s0 + $0x30] sm:$0xff]
    %v24 = vld [vmem:[%s0 + $0x38] sm:$0xff]
    %v25 = vld [vmem:[%s0 + $0x40] sm:$0xff]
    %v26 = vld [vmem:[%s0 + $0x48] sm:$0xff]
    %v27 = vld [vmem:[%s0 + $0x50] sm:$0xff]
    %v28 = vld [vmem:[%s0 + $0x58] sm:$0xff]
    %v29 = vld [vmem:[%s0 + $0x60] sm:$0xff]
    %v30 = vld [vmem:[%s0 + $0x68] sm:$0xff]
    %v31 = vld [vmem:[%s0 + $0x70] sm:$0xff]
    %v32 = vld [vmem:[%s0 + $0x78] sm:$0xff]
    %v33 = vld [vmem:[%s0 + $0x80] sm:$0xff]
    %v34 = vld [vmem:[%s0 + $0x88] sm:$0xff]
    %v35 = vld [vmem:[%s0 + $0x90] sm:$0xff]
    %v36 = vld [vmem:[%s0 + $0x98] sm:$0xff]
    %v37 = vld [vmem:[%s0 + $0xa0] sm:$0xff]
    %v38 = vld [vmem:[%s0 + $0xa8] sm:$0xff]
    %v39 = vld [vmem:[%s0 + $0xb0] sm:$0xff]
    %v40 = vld [vmem:[%s0 + $0xb8] sm:$0xff]
    %v41 = vld [vmem:[%s0 + $0xc0] sm:$0xff]
    %v42 = vld [vmem:[%s0 + $0xc8] sm:$0xff]
    %v43 = vld [vmem:[%s0 + $0xd0] sm:$0xff]
    %v44 = vld [vmem:[%s0 + $0xd8] sm:$0xff]
    %v45 = vld [vmem:[%s0 + $0xe0] sm:$0xff]
    %v46 = vld [vmem:[%s0 + $0xe8] sm:$0xff]
    %v47 = vld [vmem:[%s0 + $0xf0] sm:$0xff]
    %v48 = vld [vmem:[%s0 + $0xf8] sm:$0xff]
    %v49 = vld [vmem:[%s0 + $0x100] sm:$0xff]
    %v50 = vld [vmem:[%s0 + $0x108] sm:$0xff]
    %v51 = vld [vmem:[%s0 + $0x110] sm:$0xff]
    %v52 = vld [vmem:[%s0 + $0x118] sm:$0xff]
    %v53 = vld [vmem:[%s0 + $0x120] sm:$0xff]
    %v54 = vld [vmem:[%s0 + $0x128] sm:$0xff]
    %v55 = vld [vmem:[%s0 + $0x130] sm:$0xff]
    %v56 = vld [vmem:[%s0 + $0x138] sm:$0xff]
    %v57 = vld [vmem:[%s0 + $0x140] sm:$0xff]
    %v58 = vld [vmem:[%s0 + $0x148] sm:$0xff]
    %v59 = vld [vmem:[%s0 + $0x150] sm:$0xff]
    %v60 = vld [vmem:[%s0 + $0x158] sm:$0xff]
    %v61 = vld [vmem:[%s0 + $0x160] sm:$0xff]
    %v62 = vld [vmem:[%s0 + $0x168] sm:$0xff]
    %v63 = vld [vmem:[%s0 + $0x170] sm:$0xff]
    %v64 = vld [vmem:[%s0 + $0x178] sm:$0xff]
    %v65 = vld [vmem:[%s0 + $0x180] sm:$0xff]
    %v66 = vld [vmem:[%s0 + $0x188] sm:$0xff]
    %v67 = vld [vmem:[%s0 + $0x190] sm:$0xff]
    %v68 = vld [vmem:[%s0 + $0x198] sm:$0xff]
    %v69 = vld [vmem:[%s0 + $0x1a0] sm:$0xff]
    %v70 = vld [vmem:[%s0 + $0x1a8] sm:$0xff]
    %v71 = vld [vmem:[%s0 + $0x1b0] sm:$0xff]
    %v72 = vld [vmem:[%s0 + $0x1b8] sm:$0xff]
    %v73 = vld [vmem:[%s0 + $0x1c0] sm:$0xff]
    %v74 = vld [vmem:[%s0 + $0x1c8] sm:$0xff]
    %v75 = vld [vmem:[%s0 + $0x1d0] sm:$0xff]
    %v76 = vld [vmem:[%s0 + $0x1d8] sm:$0xff]
    %v77 = vld [vmem:[%s0 + $0x1e0] sm:$0xff]
    %v78 = vld [vmem:[%s0 + $0x1e8] sm:$0xff]
    %v79 = vld [vmem:[%s0 + $0x1f0] sm:$0xff]
    %v80 = vld [vmem:[%s0 + $0x1f8] sm:$0xff]
    %v81 = vld [vmem:[%s0 + $0x200] sm:$0xff]
    %v82 = vld [vmem:[%s0 + $0x208] sm:$0xff]
    %v83 = vld [vmem:[%s0 + $0x210] sm:$0xff]
    %v84 = vld [vmem:[%s0 + $0x218] sm:$0xff]
    %v85 = vld [vmem:[%s0 + $0x220] sm:$0xff]
    %v86 = vld [vmem:[%s0 + $0x228] sm:$0xff]
    %v87 = vld [vmem:[%s0 + $0x230] sm:$0xff]
    %v88 = vld [vmem:[%s0 + $0x238] sm:$0xff]
    %v89 = vld [vmem:[%s0 + $0x240] sm:$0xff]
    %v90 = vld [vmem:[%s0 + $0x248] sm:$0xff]
    %v91 = vld [vmem:[%s0 + $0x250] sm:$0xff]
    %v92 = vld [vmem:[%s0 + $0x258] sm:$0xff]
    %v93 = vld [vmem:[%s0 + $0x260] sm:$0xff]
    %v94 = vld [vmem:[%s0 + $0x268] sm:$0xff]
    %v95 = vld [vmem:[%s0 + $0x270] sm:$0xff]
    %v96 = vld [vmem:[%s0 + $0x278] sm:$0xff]
    %v97 = vld [vmem:[%s0 + $0x280] sm:$0xff]
    %v98 = vld [vmem:[%s0 + $0x288] sm:$0xff]
    %v99 = vld [vmem:[%s0 + $0x290] sm:$0xff]
    %v100 = vld [vmem:[%s0 + $0x298] sm:$0xff]
    %v101 = vld [vmem:[%s0 + $0x2a0] sm:$0xff]
    %v102 = vld [vmem:[%s0 + $0x2a8] sm:$0xff]
    %v103 = vld [vmem:[%s0 + $0x2b0] sm:$0xff]
    %v104 = vld [vmem:[%s0 + $0x2b8] sm:$0xff]
    %v105 = vld [vmem:[%s0 + $0x2c0] sm:$0xff]
    %v106 = vld [vmem:[%s0 + $0x2c8] sm:$0xff]
    %v107 = vld [vmem:[%s0 + $0x2d0] sm:$0xff]
    %v108 = vld [vmem:[%s0 + $0x2d8] sm:$0xff]
    %v109 = vld [vmem:[%s0 + $0x2e0] sm:$0xff]
    %v110 = vld [vmem:[%s0 + $0x2e8] sm:$0xff]
    %v111 = vld [vmem:[%s0 + $0x2f0] sm:$0xff]
    %v112 = vld [vmem:[%s0 + $0x2f8] sm:$0xff]
    %v113 = vld [vmem:[%s0 + $0x300] sm:$0xff]
    %v114 = vld [vmem:[%s0 + $0x308] sm:$0xff]
    %v115 = vld [vmem:[%s0 + $0x310] sm:$0xff]
    %v116 = vld [vmem:[%s0 + $0x318] sm:$0xff]
    %v117 = vld [vmem:[%s0 + $0x320] sm:$0xff]
    %v118 = vld [vmem:[%s0 + $0x328] sm:$0xff]
    %v119 = vld [vmem:[%s0 + $0x330] sm:$0xff]
    %v120 = vld [vmem:[%s0 + $0x338] sm:$0xff]
    %v121 = vld [vmem:[%s0 + $0x340] sm:$0xff]
    %v122 = vld [vmem:[%s0 + $0x348] sm:$0xff]
    %v123 = vld [vmem:[%s0 + $0x350] sm:$0xff]
    %v124 = vld [vmem:[%s0 + $0x358] sm:$0xff]
    %v125 = vld [vmem:[%s0 + $0x360] sm:$0xff]
    %v126 = vld [vmem:[%s0 + $0x368] sm:$0xff]
    %v127 = vld [vmem:[%s0 + $0x370] sm:$0xff]
    %v128 = vld [vmem:[%s0 + $0x378] sm:$0xff]
    %v129 = vld [vmem:[%s0 + $0x380] sm:$0xff]
    %v130 = vld [vmem:[%s0 + $0x388] sm:$0xff]
    %v131 = vld [vmem:[%s0 + $0x390] sm:$0xff]
    %v132 = vld [vmem:[%s0 + $0x398] sm:$0xff]
    %v133 = vld [vmem:[%s0 + $0x3a0] sm:$0xff]
    %v134 = vld [vmem:[%s0 + $0x3a8] sm:$0xff]
    %v135 = vld [vmem:[%s0 + $0x3b0] sm:$0xff]
    %v136 = vld [vmem:[%s0 + $0x3b8] sm:$0xff]
    %v137 = vld [vmem:[%s0 + $0x3c0] sm:$0xff]
    %v138 = vld [vmem:[%s0 + $0x3c8] sm:$0xff]
    %v139 = vld [vmem:[%s0 + $0x3d0] sm:$0xff]
    %v140 = vld [vmem:[%s0 + $0x3d8] sm:$0xff]
    %v141 = vld [vmem:[%s0 + $0x3e0] sm:$0xff]
    %v142 = vld [vmem:[%s0 + $0x3e8] sm:$0xff]
    %v143 = vld [vmem:[%s0 + $0x3f0] sm:$0xff]
    %v144 = vld [vmem:[%s0 + $0x3f8] sm:$0xff]
    %v145 = vld [vmem:[%s1] sm:$0xff]
    %vm146 = vcmask 64512
    %v148 = vsel %vm146, %v17, 0
    %v151 = vsel %vm146, %v18, 0
    %v154 = vsel %vm146, %v19, 0
    %v157 = vsel %vm146, %v20, 0
    %v160 = vsel %vm146, %v21, 0
    %v163 = vsel %vm146, %v22, 0
    %v166 = vsel %vm146, %v23, 0
    %v169 = vsel %vm146, %v24, 0
    %v172 = vsel %vm146, %v25, 0
    %v175 = vsel %vm146, %v26, 0
    %v178 = vsel %vm146, %v27, 0
    %v181 = vsel %vm146, %v28, 0
    %v184 = vsel %vm146, %v29, 0
    %v187 = vsel %vm146, %v30, 0
    %v190 = vsel %vm146, %v31, 0
    %v193 = vsel %vm146, %v32, 0
    %v196 = vsel %vm146, %v33, 0
    %v199 = vsel %vm146, %v34, 0
    %v202 = vsel %vm146, %v35, 0
    %v205 = vsel %vm146, %v36, 0
    %v208 = vsel %vm146, %v37, 0
    %v211 = vsel %vm146, %v38, 0
    %v214 = vsel %vm146, %v39, 0
    %v217 = vsel %vm146, %v40, 0
    %v220 = vsel %vm146, %v41, 0
    %v223 = vsel %vm146, %v42, 0
    %v226 = vsel %vm146, %v43, 0
    %v229 = vsel %vm146, %v44, 0
    %v232 = vsel %vm146, %v45, 0
    %v235 = vsel %vm146, %v46, 0
    %v238 = vsel %vm146, %v47, 0
    %v241 = vsel %vm146, %v48, 0
    %v244 = vsel %vm146, %v49, 0
    %v247 = vsel %vm146, %v50, 0
    %v250 = vsel %vm146, %v51, 0
    %v253 = vsel %vm146, %v52, 0
    %v256 = vsel %vm146, %v53, 0
    %v259 = vsel %vm146, %v54, 0
    %v262 = vsel %vm146, %v55, 0
    %v265 = vsel %vm146, %v56, 0
    %v268 = vsel %vm146, %v57, 0
    %v271 = vsel %vm146, %v58, 0
    %v274 = vsel %vm146, %v59, 0
    %v277 = vsel %vm146, %v60, 0
    %v280 = vsel %vm146, %v61, 0
    %v283 = vsel %vm146, %v62, 0
    %v286 = vsel %vm146, %v63, 0
    %v289 = vsel %vm146, %v64, 0
    %v292 = vsel %vm146, %v65, 0
    %v295 = vsel %vm146, %v66, 0
    %v298 = vsel %vm146, %v67, 0
    %v301 = vsel %vm146, %v68, 0
    %v304 = vsel %vm146, %v69, 0
    %v307 = vsel %vm146, %v70, 0
    %v310 = vsel %vm146, %v71, 0
    %v313 = vsel %vm146, %v72, 0
    %v316 = vsel %vm146, %v73, 0
    %v319 = vsel %vm146, %v74, 0
    %v322 = vsel %vm146, %v75, 0
    %v325 = vsel %vm146, %v76, 0
    %v328 = vsel %vm146, %v77, 0
    %v331 = vsel %vm146, %v78, 0
    %v334 = vsel %vm146, %v79, 0
    %v337 = vsel %vm146, %v80, 0
    %v340 = vsel %vm146, %v81, 0
    %v343 = vsel %vm146, %v82, 0
    %v346 = vsel %vm146, %v83, 0
    %v349 = vsel %vm146, %v84, 0
    %v352 = vsel %vm146, %v85, 0
    %v355 = vsel %vm146, %v86, 0
    %v358 = vsel %vm146, %v87, 0
    %v361 = vsel %vm146, %v88, 0
    %v364 = vsel %vm146, %v89, 0
    %v367 = vsel %vm146, %v90, 0
    %v370 = vsel %vm146, %v91, 0
    %v373 = vsel %vm146, %v92, 0
    %v376 = vsel %vm146, %v93, 0
    %v379 = vsel %vm146, %v94, 0
    %v382 = vsel %vm146, %v95, 0
    %v385 = vsel %vm146, %v96, 0
    %v388 = vsel %vm146, %v97, 0
    %v391 = vsel %vm146, %v98, 0
    %v394 = vsel %vm146, %v99, 0
    %v397 = vsel %vm146, %v100, 0
    %v400 = vsel %vm146, %v101, 0
    %v403 = vsel %vm146, %v102, 0
    %v406 = vsel %vm146, %v103, 0
    %v409 = vsel %vm146, %v104, 0
    %v412 = vsel %vm146, %v105, 0
    %v415 = vsel %vm146, %v106, 0
    %v418 = vsel %vm146, %v107, 0
    %v421 = vsel %vm146, %v108, 0
    %v424 = vsel %vm146, %v109, 0
    %v427 = vsel %vm146, %v110, 0
    %v430 = vsel %vm146, %v111, 0
    %v433 = vsel %vm146, %v112, 0
    %v436 = vsel %vm146, %v113, 0
    %v439 = vsel %vm146, %v114, 0
    %v442 = vsel %vm146, %v115, 0
    %v445 = vsel %vm146, %v116, 0
    %v448 = vsel %vm146, %v117, 0
    %v451 = vsel %vm146, %v118, 0
    %v454 = vsel %vm146, %v119, 0
    %v457 = vsel %vm146, %v120, 0
    %v460 = vsel %vm146, %v121, 0
    %v463 = vsel %vm146, %v122, 0
    %v466 = vsel %vm146, %v123, 0
    %v469 = vsel %vm146, %v124, 0
    %v472 = vsel %vm146, %v125, 0
    %v475 = vsel %vm146, %v126, 0
    %v478 = vsel %vm146, %v127, 0
    %v481 = vsel %vm146, %v128, 0
    %v484 = vsel %vm146, %v129, 0
    %v487 = vsel %vm146, %v130, 0
    %v490 = vsel %vm146, %v131, 0
    %v493 = vsel %vm146, %v132, 0
    %v496 = vsel %vm146, %v133, 0
    %v499 = vsel %vm146, %v134, 0
    %v502 = vsel %vm146, %v135, 0
    %v505 = vsel %vm146, %v136, 0
    %v508 = vsel %vm146, %v137, 0
    %v511 = vsel %vm146, %v138, 0
    %v514 = vsel %vm146, %v139, 0
    %v517 = vsel %vm146, %v140, 0
    %v520 = vsel %vm146, %v141, 0
    %v523 = vsel %vm146, %v142, 0
    %v526 = vsel %vm146, %v143, 0
    %v529 = vsel %vm146, %v144, 0
    %531 = vmatprep.subr.mxu0 0.0
    %532 = vmatpush1.msra.mxu0 %v145
    %533 = vmatprep.subr.mxu0 0.0
    %534 = vmatpush1.msra.mxu0 0.0
    %535 = vmatprep.subr.mxu0 0.0
    %536 = vmatpush1.msra.mxu0 0.0
    %537 = vmatprep.subr.mxu0 0.0
    %538 = vmatpush1.msra.mxu0 0.0
    %539 = vmatprep.subr.mxu0 0.0
    %540 = vmatpush1.msra.mxu0 0.0
    %541 = vmatprep.subr.mxu0 0.0
    %542 = vmatpush1.msra.mxu0 0.0
    %543 = vmatprep.subr.mxu0 0.0
    %544 = vmatpush1.msra.mxu0 0.0
    %545 = vmatprep.subr.mxu0 0.0
    %546 = vmatpush1.msra.mxu0 0.0
    %547 = vmatprep.subr.mxu0 0.0
    %548 = vmatpush1.msra.mxu0 0.0
    %549 = vmatprep.subr.mxu0 0.0
    %550 = vmatpush1.msra.mxu0 0.0
    %551 = vmatprep.subr.mxu0 0.0
    %552 = vmatpush1.msra.mxu0 0.0
    %553 = vmatprep.subr.mxu0 0.0
    %554 = vmatpush1.msra.mxu0 0.0
    %555 = vmatprep.subr.mxu0 0.0
    %556 = vmatpush1.msra.mxu0 0.0
    %557 = vmatprep.subr.mxu0 0.0
    %558 = vmatpush1.msra.mxu0 0.0
    %559 = vmatprep.subr.mxu0 0.0
    %560 = vmatpush1.msra.mxu0 0.0
    %561 = vmatprep.subr.mxu0 0.0
    %562 = vmatpush1.msra.mxu0 0.0
    %563 = vmatprep.subr.mxu0 0.0
    %564 = vmatpush1.msra.mxu0 0.0
    %565 = vmatprep.subr.mxu0 0.0
    %566 = vmatpush1.msra.mxu0 0.0
    %567 = vmatprep.subr.mxu0 0.0
    %568 = vmatpush1.msra.mxu0 0.0
    %569 = vmatprep.subr.mxu0 0.0
    %570 = vmatpush1.msra.mxu0 0.0
    %571 = vmatprep.subr.mxu0 0.0
    %572 = vmatpush1.msra.mxu0 0.0
    %573 = vmatprep.subr.mxu0 0.0
    %574 = vmatpush1.msra.mxu0 0.0
    %575 = vmatprep.subr.mxu0 0.0
    %576 = vmatpush1.msra.mxu0 0.0
    %577 = vmatprep.subr.mxu0 0.0
    %578 = vmatpush1.msra.mxu0 0.0
    %579 = vmatprep.subr.mxu0 0.0
    %580 = vmatpush1.msra.mxu0 0.0
    %581 = vmatprep.subr.mxu0 0.0
    %582 = vmatpush1.msra.mxu0 0.0
    %583 = vmatprep.subr.mxu0 0.0
    %584 = vmatpush1.msra.mxu0 0.0
    %585 = vmatprep.subr.mxu0 0.0
    %586 = vmatpush1.msra.mxu0 0.0
    %587 = vmatprep.subr.mxu0 0.0
    %588 = vmatpush1.msra.mxu0 0.0
    %589 = vmatprep.subr.mxu0 0.0
    %590 = vmatpush1.msra.mxu0 0.0
    %591 = vmatprep.subr.mxu0 0.0
    %592 = vmatpush1.msra.mxu0 0.0
    %593 = vmatprep.subr.mxu0 0.0
    %594 = vmatpush1.msra.mxu0 0.0
    %595 = vmatprep.mubr.f32.mxu0 0.0
    %596 = vmatmul.mubr.f32.gmra.mrb[0].mxu0 %v148
    %v597 = vpop.f32.mrb[0].mxu0
    %v598 = vadd.f32 0.0, %v597
    %v599 = vpop.f32.mrb[0].mxu0
    %600 = vmatprep.mubr.f32.mxu0 0.0
    %601 = vmatmul.mubr.f32.gmra.mrb[0].mxu0 %v151
    %v602 = vpop.f32.mrb[0].mxu0
    %v603 = vadd.f32 0.0, %v602
    %v604 = vpop.f32.mrb[0].mxu0
    %605 = vmatprep.mubr.f32.mxu0 0.0
    %606 = vmatmul.mubr.f32.gmra.mrb[0].mxu0 %v154
    %v607 = vpop.f32.mrb[0].mxu0
    %v608 = vadd.f32 0.0, %v607
    %v609 = vpop.f32.mrb[0].mxu0
    %610 = vmatprep.mubr.f32.mxu0 0.0
    %611 = vmatmul.mubr.f32.gmra.mrb[0].mxu0 %v157
    %v612 = vpop.f32.mrb[0].mxu0
    %v613 = vadd.f32 0.0, %v612
    %v614 = vpop.f32.mrb[0].mxu0
    %615 = vmatprep.mubr.f32.mxu0 0.0
    %616 = vmatmul.mubr.f32.gmra.mrb[0].mxu0 %v160
    %v617 = vpop.f32.mrb[0].mxu0
    %v618 = vadd.f32 0.0, %v617
    %v619 = vpop.f32.mrb[0].mxu0
    %620 = vmatprep.mubr.f32.mxu0 0.0
    %621 = vmatmul.mubr.f32.gmra.mrb[0].mxu0 %v163
    %v622 = vpop.f32.mrb[0].mxu0
    %v623 = vadd.f32 0.0, %v622
    %v624 = vpop.f32.mrb[0].mxu0
    %625 = vmatprep.mubr.f32.mxu0 0.0
    %626 = vmatmul.mubr.f32.gmra.mrb[0].mxu0 %v166
    %v627 = vpop.f32.mrb[0].mxu0
    %v628 = vadd.f32 0.0, %v627
    %v629 = vpop.f32.mrb[0].mxu0
    %630 = vmatprep.mubr.f32.mxu0 0.0
    %631 = vmatmul.mubr.f32.gmra.mrb[0].mxu0 %v169
    %v632 = vpop.f32.mrb[0].mxu0
    %v633 = vadd.f32 0.0, %v632
    %v634 = vpop.f32.mrb[0].mxu0
    %635 = vmatprep.mubr.f32.mxu0 0.0
    %636 = vmatmul.mubr.f32.gmra.mrb[0].mxu0 %v172
    %v637 = vpop.f32.mrb[0].mxu0
    %v638 = vadd.f32 0.0, %v637
    %v639 = vpop.f32.mrb[0].mxu0
    %640 = vmatprep.mubr.f32.mxu0 0.0
    %641 = vmatmul.mubr.f32.gmra.mrb[0].mxu0 %v175
    %v642 = vpop.f32.mrb[0].mxu0
    %v643 = vadd.f32 0.0, %v642
    %v644 = vpop.f32.mrb[0].mxu0
    %645 = vmatprep.mubr.f32.mxu0 0.0
    %646 = vmatmul.mubr.f32.gmra.mrb[0].mxu0 %v178
    %v647 = vpop.f32.mrb[0].mxu0
    %v648 = vadd.f32 0.0, %v647
    %v649 = vpop.f32.mrb[0].mxu0
    %650 = vmatprep.mubr.f32.mxu0 0.0
    %651 = vmatmul.mubr.f32.gmra.mrb[0].mxu0 %v181
    %v652 = vpop.f32.mrb[0].mxu0
    %v653 = vadd.f32 0.0, %v652
    %v654 = vpop.f32.mrb[0].mxu0
    %655 = vmatprep.mubr.f32.mxu0 0.0
    %656 = vmatmul.mubr.f32.gmra.mrb[0].mxu0 %v184
    %v657 = vpop.f32.mrb[0].mxu0
    %v658 = vadd.f32 0.0, %v657
    %v659 = vpop.f32.mrb[0].mxu0
    %660 = vmatprep.mubr.f32.mxu0 0.0
    %661 = vmatmul.mubr.f32.gmra.mrb[0].mxu0 %v187
    %v662 = vpop.f32.mrb[0].mxu0
    %v663 = vadd.f32 0.0, %v662
    %v664 = vpop.f32.mrb[0].mxu0
    %665 = vmatprep.mubr.f32.mxu0 0.0
    %666 = vmatmul.mubr.f32.gmra.mrb[0].mxu0 %v190
    %v667 = vpop.f32.mrb[0].mxu0
    %v668 = vadd.f32 0.0, %v667
    %v669 = vpop.f32.mrb[0].mxu0
    %670 = vmatprep.mubr.f32.mxu0 0.0
    %671 = vmatmul.mubr.f32.gmra.mrb[0].mxu0 %v193
    %v672 = vpop.f32.mrb[0].mxu0
    %v673 = vadd.f32 0.0, %v672
    %v674 = vpop.f32.mrb[0].mxu0
    %675 = vmatprep.mubr.f32.mxu0 0.0
    %676 = vmatmul.mubr.f32.gmra.mrb[0].mxu0 %v196
    %v677 = vpop.f32.mrb[0].mxu0
    %v678 = vadd.f32 0.0, %v677
    %v679 = vpop.f32.mrb[0].mxu0
    %680 = vmatprep.mubr.f32.mxu0 0.0
    %681 = vmatmul.mubr.f32.gmra.mrb[0].mxu0 %v199
    %v682 = vpop.f32.mrb[0].mxu0
    %v683 = vadd.f32 0.0, %v682
    %v684 = vpop.f32.mrb[0].mxu0
    %685 = vmatprep.mubr.f32.mxu0 0.0
    %686 = vmatmul.mubr.f32.gmra.mrb[0].mxu0 %v202
    %v687 = vpop.f32.mrb[0].mxu0
    %v688 = vadd.f32 0.0, %v687
    %v689 = vpop.f32.mrb[0].mxu0
    %690 = vmatprep.mubr.f32.mxu0 0.0
    %691 = vmatmul.mubr.f32.gmra.mrb[0].mxu0 %v205
    %v692 = vpop.f32.mrb[0].mxu0
    %v693 = vadd.f32 0.0, %v692
    %v694 = vpop.f32.mrb[0].mxu0
    %695 = vmatprep.mubr.f32.mxu0 0.0
    %696 = vmatmul.mubr.f32.gmra.mrb[0].mxu0 %v208
    %v697 = vpop.f32.mrb[0].mxu0
    %v698 = vadd.f32 0.0, %v697
    %v699 = vpop.f32.mrb[0].mxu0
    %700 = vmatprep.mubr.f32.mxu0 0.0
    %701 = vmatmul.mubr.f32.gmra.mrb[0].mxu0 %v211
    %v702 = vpop.f32.mrb[0].mxu0
    %v703 = vadd.f32 0.0, %v702
    %v704 = vpop.f32.mrb[0].mxu0
    %705 = vmatprep.mubr.f32.mxu0 0.0
    %706 = vmatmul.mubr.f32.gmra.mrb[0].mxu0 %v214
    %v707 = vpop.f32.mrb[0].mxu0
    %v708 = vadd.f32 0.0, %v707
    %v709 = vpop.f32.mrb[0].mxu0
    %710 = vmatprep.mubr.f32.mxu0 0.0
    %711 = vmatmul.mubr.f32.gmra.mrb[0].mxu0 %v217
    %v712 = vpop.f32.mrb[0].mxu0
    %v713 = vadd.f32 0.0, %v712
    %v714 = vpop.f32.mrb[0].mxu0
    %715 = vmatprep.mubr.f32.mxu0 0.0
    %716 = vmatmul.mubr.f32.gmra.mrb[0].mxu0 %v220
    %v717 = vpop.f32.mrb[0].mxu0
    %v718 = vadd.f32 0.0, %v717
    %v719 = vpop.f32.mrb[0].mxu0
    %720 = vmatprep.mubr.f32.mxu0 0.0
    %721 = vmatmul.mubr.f32.gmra.mrb[0].mxu0 %v223
    %v722 = vpop.f32.mrb[0].mxu0
    %v723 = vadd.f32 0.0, %v722
    %v724 = vpop.f32.mrb[0].mxu0
    %725 = vmatprep.mubr.f32.mxu0 0.0
    %726 = vmatmul.mubr.f32.gmra.mrb[0].mxu0 %v226
    %v727 = vpop.f32.mrb[0].mxu0
    %v728 = vadd.f32 0.0, %v727
    %v729 = vpop.f32.mrb[0].mxu0
    %730 = vmatprep.mubr.f32.mxu0 0.0
    %731 = vmatmul.mubr.f32.gmra.mrb[0].mxu0 %v229
    %v732 = vpop.f32.mrb[0].mxu0
    %v733 = vadd.f32 0.0, %v732
    %v734 = vpop.f32.mrb[0].mxu0
    %735 = vmatprep.mubr.f32.mxu0 0.0
    %736 = vmatmul.mubr.f32.gmra.mrb[0].mxu0 %v232
    %v737 = vpop.f32.mrb[0].mxu0
    %v738 = vadd.f32 0.0, %v737
    %v739 = vpop.f32.mrb[0].mxu0
    %740 = vmatprep.mubr.f32.mxu0 0.0
    %741 = vmatmul.mubr.f32.gmra.mrb[0].mxu0 %v235
    %v742 = vpop.f32.mrb[0].mxu0
    %v743 = vadd.f32 0.0, %v742
    %v744 = vpop.f32.mrb[0].mxu0
    %745 = vmatprep.mubr.f32.mxu0 0.0
    %746 = vmatmul.mubr.f32.gmra.mrb[0].mxu0 %v238
    %v747 = vpop.f32.mrb[0].mxu0
    %v748 = vadd.f32 0.0, %v747
    %v749 = vpop.f32.mrb[0].mxu0
    %750 = vmatprep.mubr.f32.mxu0 0.0
    %751 = vmatmul.mubr.f32.gmra.mrb[0].mxu0 %v241
    %v752 = vpop.f32.mrb[0].mxu0
    %v753 = vadd.f32 0.0, %v752
    %v754 = vpop.f32.mrb[0].mxu0
    %755 = vmatprep.mubr.f32.mxu0 0.0
    %756 = vmatmul.mubr.f32.gmra.mrb[0].mxu0 %v244
    %v757 = vpop.f32.mrb[0].mxu0
    %v758 = vadd.f32 0.0, %v757
    %v759 = vpop.f32.mrb[0].mxu0
    %760 = vmatprep.mubr.f32.mxu0 0.0
    %761 = vmatmul.mubr.f32.gmra.mrb[0].mxu0 %v247
    %v762 = vpop.f32.mrb[0].mxu0
    %v763 = vadd.f32 0.0, %v762
    %v764 = vpop.f32.mrb[0].mxu0
    %765 = vmatprep.mubr.f32.mxu0 0.0
    %766 = vmatmul.mubr.f32.gmra.mrb[0].mxu0 %v250
    %v767 = vpop.f32.mrb[0].mxu0
    %v768 = vadd.f32 0.0, %v767
    %v769 = vpop.f32.mrb[0].mxu0
    %770 = vmatprep.mubr.f32.mxu0 0.0
    %771 = vmatmul.mubr.f32.gmra.mrb[0].mxu0 %v253
    %v772 = vpop.f32.mrb[0].mxu0
    %v773 = vadd.f32 0.0, %v772
    %v774 = vpop.f32.mrb[0].mxu0
    %775 = vmatprep.mubr.f32.mxu0 0.0
    %776 = vmatmul.mubr.f32.gmra.mrb[0].mxu0 %v256
    %v777 = vpop.f32.mrb[0].mxu0
    %v778 = vadd.f32 0.0, %v777
    %v779 = vpop.f32.mrb[0].mxu0
    %780 = vmatprep.mubr.f32.mxu0 0.0
    %781 = vmatmul.mubr.f32.gmra.mrb[0].mxu0 %v259
    %v782 = vpop.f32.mrb[0].mxu0
    %v783 = vadd.f32 0.0, %v782
    %v784 = vpop.f32.mrb[0].mxu0
    %785 = vmatprep.mubr.f32.mxu0 0.0
    %786 = vmatmul.mubr.f32.gmra.mrb[0].mxu0 %v262
    %v787 = vpop.f32.mrb[0].mxu0
    %v788 = vadd.f32 0.0, %v787
    %v789 = vpop.f32.mrb[0].mxu0
    %790 = vmatprep.mubr.f32.mxu0 0.0
    %791 = vmatmul.mubr.f32.gmra.mrb[0].mxu0 %v265
    %v792 = vpop.f32.mrb[0].mxu0
    %v793 = vadd.f32 0.0, %v792
    %v794 = vpop.f32.mrb[0].mxu0
    %795 = vmatprep.mubr.f32.mxu0 0.0
    %796 = vmatmul.mubr.f32.gmra.mrb[0].mxu0 %v268
    %v797 = vpop.f32.mrb[0].mxu0
    %v798 = vadd.f32 0.0, %v797
    %v799 = vpop.f32.mrb[0].mxu0
    %800 = vmatprep.mubr.f32.mxu0 0.0
    %801 = vmatmul.mubr.f32.gmra.mrb[0].mxu0 %v271
    %v802 = vpop.f32.mrb[0].mxu0
    %v803 = vadd.f32 0.0, %v802
    %v804 = vpop.f32.mrb[0].mxu0
    %805 = vmatprep.mubr.f32.mxu0 0.0
    %806 = vmatmul.mubr.f32.gmra.mrb[0].mxu0 %v274
    %v807 = vpop.f32.mrb[0].mxu0
    %v808 = vadd.f32 0.0, %v807
    %v809 = vpop.f32.mrb[0].mxu0
    %810 = vmatprep.mubr.f32.mxu0 0.0
    %811 = vmatmul.mubr.f32.gmra.mrb[0].mxu0 %v277
    %v812 = vpop.f32.mrb[0].mxu0
    %v813 = vadd.f32 0.0, %v812
    %v814 = vpop.f32.mrb[0].mxu0
    %815 = vmatprep.mubr.f32.mxu0 0.0
    %816 = vmatmul.mubr.f32.gmra.mrb[0].mxu0 %v280
    %v817 = vpop.f32.mrb[0].mxu0
    %v818 = vadd.f32 0.0, %v817
    %v819 = vpop.f32.mrb[0].mxu0
    %820 = vmatprep.mubr.f32.mxu0 0.0
    %821 = vmatmul.mubr.f32.gmra.mrb[0].mxu0 %v283
    %v822 = vpop.f32.mrb[0].mxu0
    %v823 = vadd.f32 0.0, %v822
    %v824 = vpop.f32.mrb[0].mxu0
    %825 = vmatprep.mubr.f32.mxu0 0.0
    %826 = vmatmul.mubr.f32.gmra.mrb[0].mxu0 %v286
    %v827 = vpop.f32.mrb[0].mxu0
    %v828 = vadd.f32 0.0, %v827
    %v829 = vpop.f32.mrb[0].mxu0
    %830 = vmatprep.mubr.f32.mxu0 0.0
    %831 = vmatmul.mubr.f32.gmra.mrb[0].mxu0 %v289
    %v832 = vpop.f32.mrb[0].mxu0
    %v833 = vadd.f32 0.0, %v832
    %v834 = vpop.f32.mrb[0].mxu0
    %835 = vmatprep.mubr.f32.mxu0 0.0
    %836 = vmatmul.mubr.f32.gmra.mrb[0].mxu0 %v292
    %v837 = vpop.f32.mrb[0].mxu0
    %v838 = vadd.f32 0.0, %v837
    %v839 = vpop.f32.mrb[0].mxu0
    %840 = vmatprep.mubr.f32.mxu0 0.0
    %841 = vmatmul.mubr.f32.gmra.mrb[0].mxu0 %v295
    %v842 = vpop.f32.mrb[0].mxu0
    %v843 = vadd.f32 0.0, %v842
    %v844 = vpop.f32.mrb[0].mxu0
    %845 = vmatprep.mubr.f32.mxu0 0.0
    %846 = vmatmul.mubr.f32.gmra.mrb[0].mxu0 %v298
    %v847 = vpop.f32.mrb[0].mxu0
    %v848 = vadd.f32 0.0, %v847
    %v849 = vpop.f32.mrb[0].mxu0
    %850 = vmatprep.mubr.f32.mxu0 0.0
    %851 = vmatmul.mubr.f32.gmra.mrb[0].mxu0 %v301
    %v852 = vpop.f32.mrb[0].mxu0
    %v853 = vadd.f32 0.0, %v852
    %v854 = vpop.f32.mrb[0].mxu0
    %855 = vmatprep.mubr.f32.mxu0 0.0
    %856 = vmatmul.mubr.f32.gmra.mrb[0].mxu0 %v304
    %v857 = vpop.f32.mrb[0].mxu0
    %v858 = vadd.f32 0.0, %v857
    %v859 = vpop.f32.mrb[0].mxu0
    %860 = vmatprep.mubr.f32.mxu0 0.0
    %861 = vmatmul.mubr.f32.gmra.mrb[0].mxu0 %v307
    %v862 = vpop.f32.mrb[0].mxu0
    %v863 = vadd.f32 0.0, %v862
    %v864 = vpop.f32.mrb[0].mxu0
    %865 = vmatprep.mubr.f32.mxu0 0.0
    %866 = vmatmul.mubr.f32.gmra.mrb[0].mxu0 %v310
    %v867 = vpop.f32.mrb[0].mxu0
    %v868 = vadd.f32 0.0, %v867
    %v869 = vpop.f32.mrb[0].mxu0
    %870 = vmatprep.mubr.f32.mxu0 0.0
    %871 = vmatmul.mubr.f32.gmra.mrb[0].mxu0 %v313
    %v872 = vpop.f32.mrb[0].mxu0
    %v873 = vadd.f32 0.0, %v872
    %v874 = vpop.f32.mrb[0].mxu0
    %875 = vmatprep.mubr.f32.mxu0 0.0
    %876 = vmatmul.mubr.f32.gmra.mrb[0].mxu0 %v316
    %v877 = vpop.f32.mrb[0].mxu0
    %v878 = vadd.f32 0.0, %v877
    %v879 = vpop.f32.mrb[0].mxu0
    %880 = vmatprep.mubr.f32.mxu0 0.0
    %881 = vmatmul.mubr.f32.gmra.mrb[0].mxu0 %v319
    %v882 = vpop.f32.mrb[0].mxu0
    %v883 = vadd.f32 0.0, %v882
    %v884 = vpop.f32.mrb[0].mxu0
    %885 = vmatprep.mubr.f32.mxu0 0.0
    %886 = vmatmul.mubr.f32.gmra.mrb[0].mxu0 %v322
    %v887 = vpop.f32.mrb[0].mxu0
    %v888 = vadd.f32 0.0, %v887
    %v889 = vpop.f32.mrb[0].mxu0
    %890 = vmatprep.mubr.f32.mxu0 0.0
    %891 = vmatmul.mubr.f32.gmra.mrb[0].mxu0 %v325
    %v892 = vpop.f32.mrb[0].mxu0
    %v893 = vadd.f32 0.0, %v892
    %v894 = vpop.f32.mrb[0].mxu0
    %895 = vmatprep.mubr.f32.mxu0 0.0
    %896 = vmatmul.mubr.f32.gmra.mrb[0].mxu0 %v328
    %v897 = vpop.f32.mrb[0].mxu0
    %v898 = vadd.f32 0.0, %v897
    %v899 = vpop.f32.mrb[0].mxu0
    %900 = vmatprep.mubr.f32.mxu0 0.0
    %901 = vmatmul.mubr.f32.gmra.mrb[0].mxu0 %v331
    %v902 = vpop.f32.mrb[0].mxu0
    %v903 = vadd.f32 0.0, %v902
    %v904 = vpop.f32.mrb[0].mxu0
    %905 = vmatprep.mubr.f32.mxu0 0.0
    %906 = vmatmul.mubr.f32.gmra.mrb[0].mxu0 %v334
    %v907 = vpop.f32.mrb[0].mxu0
    %v908 = vadd.f32 0.0, %v907
    %v909 = vpop.f32.mrb[0].mxu0
    %910 = vmatprep.mubr.f32.mxu0 0.0
    %911 = vmatmul.mubr.f32.gmra.mrb[0].mxu0 %v337
    %v912 = vpop.f32.mrb[0].mxu0
    %v913 = vadd.f32 0.0, %v912
    %v914 = vpop.f32.mrb[0].mxu0
    %915 = vmatprep.mubr.f32.mxu0 0.0
    %916 = vmatmul.mubr.f32.gmra.mrb[0].mxu0 %v340
    %v917 = vpop.f32.mrb[0].mxu0
    %v918 = vadd.f32 0.0, %v917
    %v919 = vpop.f32.mrb[0].mxu0
    %920 = vmatprep.mubr.f32.mxu0 0.0
    %921 = vmatmul.mubr.f32.gmra.mrb[0].mxu0 %v343
    %v922 = vpop.f32.mrb[0].mxu0
    %v923 = vadd.f32 0.0, %v922
    %v924 = vpop.f32.mrb[0].mxu0
    %925 = vmatprep.mubr.f32.mxu0 0.0
    %926 = vmatmul.mubr.f32.gmra.mrb[0].mxu0 %v346
    %v927 = vpop.f32.mrb[0].mxu0
    %v928 = vadd.f32 0.0, %v927
    %v929 = vpop.f32.mrb[0].mxu0
    %930 = vmatprep.mubr.f32.mxu0 0.0
    %931 = vmatmul.mubr.f32.gmra.mrb[0].mxu0 %v349
    %v932 = vpop.f32.mrb[0].mxu0
    %v933 = vadd.f32 0.0, %v932
    %v934 = vpop.f32.mrb[0].mxu0
    %935 = vmatprep.mubr.f32.mxu0 0.0
    %936 = vmatmul.mubr.f32.gmra.mrb[0].mxu0 %v352
    %v937 = vpop.f32.mrb[0].mxu0
    %v938 = vadd.f32 0.0, %v937
    %v939 = vpop.f32.mrb[0].mxu0
    %940 = vmatprep.mubr.f32.mxu0 0.0
    %941 = vmatmul.mubr.f32.gmra.mrb[0].mxu0 %v355
    %v942 = vpop.f32.mrb[0].mxu0
    %v943 = vadd.f32 0.0, %v942
    %v944 = vpop.f32.mrb[0].mxu0
    %945 = vmatprep.mubr.f32.mxu0 0.0
    %946 = vmatmul.mubr.f32.gmra.mrb[0].mxu0 %v358
    %v947 = vpop.f32.mrb[0].mxu0
    %v948 = vadd.f32 0.0, %v947
    %v949 = vpop.f32.mrb[0].mxu0
    %950 = vmatprep.mubr.f32.mxu0 0.0
    %951 = vmatmul.mubr.f32.gmra.mrb[0].mxu0 %v361
    %v952 = vpop.f32.mrb[0].mxu0
    %v953 = vadd.f32 0.0, %v952
    %v954 = vpop.f32.mrb[0].mxu0
    %955 = vmatprep.mubr.f32.mxu0 0.0
    %956 = vmatmul.mubr.f32.gmra.mrb[0].mxu0 %v364
    %v957 = vpop.f32.mrb[0].mxu0
    %v958 = vadd.f32 0.0, %v957
    %v959 = vpop.f32.mrb[0].mxu0
    %960 = vmatprep.mubr.f32.mxu0 0.0
    %961 = vmatmul.mubr.f32.gmra.mrb[0].mxu0 %v367
    %v962 = vpop.f32.mrb[0].mxu0
    %v963 = vadd.f32 0.0, %v962
    %v964 = vpop.f32.mrb[0].mxu0
    %965 = vmatprep.mubr.f32.mxu0 0.0
    %966 = vmatmul.mubr.f32.gmra.mrb[0].mxu0 %v370
    %v967 = vpop.f32.mrb[0].mxu0
    %v968 = vadd.f32 0.0, %v967
    %v969 = vpop.f32.mrb[0].mxu0
    %970 = vmatprep.mubr.f32.mxu0 0.0
    %971 = vmatmul.mubr.f32.gmra.mrb[0].mxu0 %v373
    %v972 = vpop.f32.mrb[0].mxu0
    %v973 = vadd.f32 0.0, %v972
    %v974 = vpop.f32.mrb[0].mxu0
    %975 = vmatprep.mubr.f32.mxu0 0.0
    %976 = vmatmul.mubr.f32.gmra.mrb[0].mxu0 %v376
    %v977 = vpop.f32.mrb[0].mxu0
    %v978 = vadd.f32 0.0, %v977
    %v979 = vpop.f32.mrb[0].mxu0
    %980 = vmatprep.mubr.f32.mxu0 0.0
    %981 = vmatmul.mubr.f32.gmra.mrb[0].mxu0 %v379
    %v982 = vpop.f32.mrb[0].mxu0
    %v983 = vadd.f32 0.0, %v982
    %v984 = vpop.f32.mrb[0].mxu0
    %985 = vmatprep.mubr.f32.mxu0 0.0
    %986 = vmatmul.mubr.f32.gmra.mrb[0].mxu0 %v382
    %v987 = vpop.f32.mrb[0].mxu0
    %v988 = vadd.f32 0.0, %v987
    %v989 = vpop.f32.mrb[0].mxu0
    %990 = vmatprep.mubr.f32.mxu0 0.0
    %991 = vmatmul.mubr.f32.gmra.mrb[0].mxu0 %v385
    %v992 = vpop.f32.mrb[0].mxu0
    %v993 = vadd.f32 0.0, %v992
    %v994 = vpop.f32.mrb[0].mxu0
    %995 = vmatprep.mubr.f32.mxu0 0.0
    %996 = vmatmul.mubr.f32.gmra.mrb[0].mxu0 %v388
    %v997 = vpop.f32.mrb[0].mxu0
    %v998 = vadd.f32 0.0, %v997
    %v999 = vpop.f32.mrb[0].mxu0
    %1000 = vmatprep.mubr.f32.mxu0 0.0
    %1001 = vmatmul.mubr.f32.gmra.mrb[0].mxu0 %v391
    %v1002 = vpop.f32.mrb[0].mxu0
    %v1003 = vadd.f32 0.0, %v1002
    %v1004 = vpop.f32.mrb[0].mxu0
    %1005 = vmatprep.mubr.f32.mxu0 0.0
    %1006 = vmatmul.mubr.f32.gmra.mrb[0].mxu0 %v394
    %v1007 = vpop.f32.mrb[0].mxu0
    %v1008 = vadd.f32 0.0, %v1007
    %v1009 = vpop.f32.mrb[0].mxu0
    %1010 = vmatprep.mubr.f32.mxu0 0.0
    %1011 = vmatmul.mubr.f32.gmra.mrb[0].mxu0 %v397
    %v1012 = vpop.f32.mrb[0].mxu0
    %v1013 = vadd.f32 0.0, %v1012
    %v1014 = vpop.f32.mrb[0].mxu0
    %1015 = vmatprep.mubr.f32.mxu0 0.0
    %1016 = vmatmul.mubr.f32.gmra.mrb[0].mxu0 %v400
    %v1017 = vpop.f32.mrb[0].mxu0
    %v1018 = vadd.f32 0.0, %v1017
    %v1019 = vpop.f32.mrb[0].mxu0
    %1020 = vmatprep.mubr.f32.mxu0 0.0
    %1021 = vmatmul.mubr.f32.gmra.mrb[0].mxu0 %v403
    %v1022 = vpop.f32.mrb[0].mxu0
    %v1023 = vadd.f32 0.0, %v1022
    %v1024 = vpop.f32.mrb[0].mxu0
    %1025 = vmatprep.mubr.f32.mxu0 0.0
    %1026 = vmatmul.mubr.f32.gmra.mrb[0].mxu0 %v406
    %v1027 = vpop.f32.mrb[0].mxu0
    %v1028 = vadd.f32 0.0, %v1027
    %v1029 = vpop.f32.mrb[0].mxu0
    %1030 = vmatprep.mubr.f32.mxu0 0.0
    %1031 = vmatmul.mubr.f32.gmra.mrb[0].mxu0 %v409
    %v1032 = vpop.f32.mrb[0].mxu0
    %v1033 = vadd.f32 0.0, %v1032
    %v1034 = vpop.f32.mrb[0].mxu0
    %1035 = vmatprep.mubr.f32.mxu0 0.0
    %1036 = vmatmul.mubr.f32.gmra.mrb[0].mxu0 %v412
    %v1037 = vpop.f32.mrb[0].mxu0
    %v1038 = vadd.f32 0.0, %v1037
    %v1039 = vpop.f32.mrb[0].mxu0
    %1040 = vmatprep.mubr.f32.mxu0 0.0
    %1041 = vmatmul.mubr.f32.gmra.mrb[0].mxu0 %v415
    %v1042 = vpop.f32.mrb[0].mxu0
    %v1043 = vadd.f32 0.0, %v1042
    %v1044 = vpop.f32.mrb[0].mxu0
    %1045 = vmatprep.mubr.f32.mxu0 0.0
    %1046 = vmatmul.mubr.f32.gmra.mrb[0].mxu0 %v418
    %v1047 = vpop.f32.mrb[0].mxu0
    %v1048 = vadd.f32 0.0, %v1047
    %v1049 = vpop.f32.mrb[0].mxu0
    %1050 = vmatprep.mubr.f32.mxu0 0.0
    %1051 = vmatmul.mubr.f32.gmra.mrb[0].mxu0 %v421
    %v1052 = vpop.f32.mrb[0].mxu0
    %v1053 = vadd.f32 0.0, %v1052
    %v1054 = vpop.f32.mrb[0].mxu0
    %1055 = vmatprep.mubr.f32.mxu0 0.0
    %1056 = vmatmul.mubr.f32.gmra.mrb[0].mxu0 %v424
    %v1057 = vpop.f32.mrb[0].mxu0
    %v1058 = vadd.f32 0.0, %v1057
    %v1059 = vpop.f32.mrb[0].mxu0
    %1060 = vmatprep.mubr.f32.mxu0 0.0
    %1061 = vmatmul.mubr.f32.gmra.mrb[0].mxu0 %v427
    %v1062 = vpop.f32.mrb[0].mxu0
    %v1063 = vadd.f32 0.0, %v1062
    %v1064 = vpop.f32.mrb[0].mxu0
    %1065 = vmatprep.mubr.f32.mxu0 0.0
    %1066 = vmatmul.mubr.f32.gmra.mrb[0].mxu0 %v430
    %v1067 = vpop.f32.mrb[0].mxu0
    %v1068 = vadd.f32 0.0, %v1067
    %v1069 = vpop.f32.mrb[0].mxu0
    %1070 = vmatprep.mubr.f32.mxu0 0.0
    %1071 = vmatmul.mubr.f32.gmra.mrb[0].mxu0 %v433
    %v1072 = vpop.f32.mrb[0].mxu0
    %v1073 = vadd.f32 0.0, %v1072
    %v1074 = vpop.f32.mrb[0].mxu0
    %1075 = vmatprep.mubr.f32.mxu0 0.0
    %1076 = vmatmul.mubr.f32.gmra.mrb[0].mxu0 %v436
    %v1077 = vpop.f32.mrb[0].mxu0
    %v1078 = vadd.f32 0.0, %v1077
    %v1079 = vpop.f32.mrb[0].mxu0
    %1080 = vmatprep.mubr.f32.mxu0 0.0
    %1081 = vmatmul.mubr.f32.gmra.mrb[0].mxu0 %v439
    %v1082 = vpop.f32.mrb[0].mxu0
    %v1083 = vadd.f32 0.0, %v1082
    %v1084 = vpop.f32.mrb[0].mxu0
    %1085 = vmatprep.mubr.f32.mxu0 0.0
    %1086 = vmatmul.mubr.f32.gmra.mrb[0].mxu0 %v442
    %v1087 = vpop.f32.mrb[0].mxu0
    %v1088 = vadd.f32 0.0, %v1087
    %v1089 = vpop.f32.mrb[0].mxu0
    %1090 = vmatprep.mubr.f32.mxu0 0.0
    %1091 = vmatmul.mubr.f32.gmra.mrb[0].mxu0 %v445
    %v1092 = vpop.f32.mrb[0].mxu0
    %v1093 = vadd.f32 0.0, %v1092
    %v1094 = vpop.f32.mrb[0].mxu0
    %1095 = vmatprep.mubr.f32.mxu0 0.0
    %1096 = vmatmul.mubr.f32.gmra.mrb[0].mxu0 %v448
    %v1097 = vpop.f32.mrb[0].mxu0
    %v1098 = vadd.f32 0.0, %v1097
    %v1099 = vpop.f32.mrb[0].mxu0
    %1100 = vmatprep.mubr.f32.mxu0 0.0
    %1101 = vmatmul.mubr.f32.gmra.mrb[0].mxu0 %v451
    %v1102 = vpop.f32.mrb[0].mxu0
    %v1103 = vadd.f32 0.0, %v1102
    %v1104 = vpop.f32.mrb[0].mxu0
    %1105 = vmatprep.mubr.f32.mxu0 0.0
    %1106 = vmatmul.mubr.f32.gmra.mrb[0].mxu0 %v454
    %v1107 = vpop.f32.mrb[0].mxu0
    %v1108 = vadd.f32 0.0, %v1107
    %v1109 = vpop.f32.mrb[0].mxu0
    %1110 = vmatprep.mubr.f32.mxu0 0.0
    %1111 = vmatmul.mubr.f32.gmra.mrb[0].mxu0 %v457
    %v1112 = vpop.f32.mrb[0].mxu0
    %v1113 = vadd.f32 0.0, %v1112
    %v1114 = vpop.f32.mrb[0].mxu0
    %1115 = vmatprep.mubr.f32.mxu0 0.0
    %1116 = vmatmul.mubr.f32.gmra.mrb[0].mxu0 %v460
    %v1117 = vpop.f32.mrb[0].mxu0
    %v1118 = vadd.f32 0.0, %v1117
    %v1119 = vpop.f32.mrb[0].mxu0
    %1120 = vmatprep.mubr.f32.mxu0 0.0
    %1121 = vmatmul.mubr.f32.gmra.mrb[0].mxu0 %v463
    %v1122 = vpop.f32.mrb[0].mxu0
    %v1123 = vadd.f32 0.0, %v1122
    %v1124 = vpop.f32.mrb[0].mxu0
    %1125 = vmatprep.mubr.f32.mxu0 0.0
    %1126 = vmatmul.mubr.f32.gmra.mrb[0].mxu0 %v466
    %v1127 = vpop.f32.mrb[0].mxu0
    %v1128 = vadd.f32 0.0, %v1127
    %v1129 = vpop.f32.mrb[0].mxu0
    %1130 = vmatprep.mubr.f32.mxu0 0.0
    %1131 = vmatmul.mubr.f32.gmra.mrb[0].mxu0 %v469
    %v1132 = vpop.f32.mrb[0].mxu0
    %v1133 = vadd.f32 0.0, %v1132
    %v1134 = vpop.f32.mrb[0].mxu0
    %1135 = vmatprep.mubr.f32.mxu0 0.0
    %1136 = vmatmul.mubr.f32.gmra.mrb[0].mxu0 %v472
    %v1137 = vpop.f32.mrb[0].mxu0
    %v1138 = vadd.f32 0.0, %v1137
    %v1139 = vpop.f32.mrb[0].mxu0
    %1140 = vmatprep.mubr.f32.mxu0 0.0
    %1141 = vmatmul.mubr.f32.gmra.mrb[0].mxu0 %v475
    %v1142 = vpop.f32.mrb[0].mxu0
    %v1143 = vadd.f32 0.0, %v1142
    %v1144 = vpop.f32.mrb[0].mxu0
    %1145 = vmatprep.mubr.f32.mxu0 0.0
    %1146 = vmatmul.mubr.f32.gmra.mrb[0].mxu0 %v478
    %v1147 = vpop.f32.mrb[0].mxu0
    %v1148 = vadd.f32 0.0, %v1147
    %v1149 = vpop.f32.mrb[0].mxu0
    %1150 = vmatprep.mubr.f32.mxu0 0.0
    %1151 = vmatmul.mubr.f32.gmra.mrb[0].mxu0 %v481
    %v1152 = vpop.f32.mrb[0].mxu0
    %v1153 = vadd.f32 0.0, %v1152
    %v1154 = vpop.f32.mrb[0].mxu0
    %1155 = vmatprep.mubr.f32.mxu0 0.0
    %1156 = vmatmul.mubr.f32.gmra.mrb[0].mxu0 %v484
    %v1157 = vpop.f32.mrb[0].mxu0
    %v1158 = vadd.f32 0.0, %v1157
    %v1159 = vpop.f32.mrb[0].mxu0
    %1160 = vmatprep.mubr.f32.mxu0 0.0
    %1161 = vmatmul.mubr.f32.gmra.mrb[0].mxu0 %v487
    %v1162 = vpop.f32.mrb[0].mxu0
    %v1163 = vadd.f32 0.0, %v1162
    %v1164 = vpop.f32.mrb[0].mxu0
    %1165 = vmatprep.mubr.f32.mxu0 0.0
    %1166 = vmatmul.mubr.f32.gmra.mrb[0].mxu0 %v490
    %v1167 = vpop.f32.mrb[0].mxu0
    %v1168 = vadd.f32 0.0, %v1167
    %v1169 = vpop.f32.mrb[0].mxu0
    %1170 = vmatprep.mubr.f32.mxu0 0.0
    %1171 = vmatmul.mubr.f32.gmra.mrb[0].mxu0 %v493
    %v1172 = vpop.f32.mrb[0].mxu0
    %v1173 = vadd.f32 0.0, %v1172
    %v1174 = vpop.f32.mrb[0].mxu0
    %1175 = vmatprep.mubr.f32.mxu0 0.0
    %1176 = vmatmul.mubr.f32.gmra.mrb[0].mxu0 %v496
    %v1177 = vpop.f32.mrb[0].mxu0
    %v1178 = vadd.f32 0.0, %v1177
    %v1179 = vpop.f32.mrb[0].mxu0
    %1180 = vmatprep.mubr.f32.mxu0 0.0
    %1181 = vmatmul.mubr.f32.gmra.mrb[0].mxu0 %v499
    %v1182 = vpop.f32.mrb[0].mxu0
    %v1183 = vadd.f32 0.0, %v1182
    %v1184 = vpop.f32.mrb[0].mxu0
    %1185 = vmatprep.mubr.f32.mxu0 0.0
    %1186 = vmatmul.mubr.f32.gmra.mrb[0].mxu0 %v502
    %v1187 = vpop.f32.mrb[0].mxu0
    %v1188 = vadd.f32 0.0, %v1187
    %v1189 = vpop.f32.mrb[0].mxu0
    %1190 = vmatprep.mubr.f32.mxu0 0.0
    %1191 = vmatmul.mubr.f32.gmra.mrb[0].mxu0 %v505
    %v1192 = vpop.f32.mrb[0].mxu0
    %v1193 = vadd.f32 0.0, %v1192
    %v1194 = vpop.f32.mrb[0].mxu0
    %1195 = vmatprep.mubr.f32.mxu0 0.0
    %1196 = vmatmul.mubr.f32.gmra.mrb[0].mxu0 %v508
    %v1197 = vpop.f32.mrb[0].mxu0
    %v1198 = vadd.f32 0.0, %v1197
    %v1199 = vpop.f32.mrb[0].mxu0
    %1200 = vmatprep.mubr.f32.mxu0 0.0
    %1201 = vmatmul.mubr.f32.gmra.mrb[0].mxu0 %v511
    %v1202 = vpop.f32.mrb[0].mxu0
    %v1203 = vadd.f32 0.0, %v1202
    %v1204 = vpop.f32.mrb[0].mxu0
    %1205 = vmatprep.mubr.f32.mxu0 0.0
    %1206 = vmatmul.mubr.f32.gmra.mrb[0].mxu0 %v514
    %v1207 = vpop.f32.mrb[0].mxu0
    %v1208 = vadd.f32 0.0, %v1207
    %v1209 = vpop.f32.mrb[0].mxu0
    %1210 = vmatprep.mubr.f32.mxu0 0.0
    %1211 = vmatmul.mubr.f32.gmra.mrb[0].mxu0 %v517
    %v1212 = vpop.f32.mrb[0].mxu0
    %v1213 = vadd.f32 0.0, %v1212
    %v1214 = vpop.f32.mrb[0].mxu0
    %1215 = vmatprep.mubr.f32.mxu0 0.0
    %1216 = vmatmul.mubr.f32.gmra.mrb[0].mxu0 %v520
    %v1217 = vpop.f32.mrb[0].mxu0
    %v1218 = vadd.f32 0.0, %v1217
    %v1219 = vpop.f32.mrb[0].mxu0
    %1220 = vmatprep.mubr.f32.mxu0 0.0
    %1221 = vmatmul.mubr.f32.gmra.mrb[0].mxu0 %v523
    %v1222 = vpop.f32.mrb[0].mxu0
    %v1223 = vadd.f32 0.0, %v1222
    %v1224 = vpop.f32.mrb[0].mxu0
    %1225 = vmatprep.mubr.f32.mxu0 0.0
    %1226 = vmatmul.mubr.f32.gmra.mrb[0].mxu0 %v526
    %v1227 = vpop.f32.mrb[0].mxu0
    %v1228 = vadd.f32 0.0, %v1227
    %v1229 = vpop.f32.mrb[0].mxu0
    %1230 = vmatprep.mubr.f32.mxu0 0.0
    %1231 = vmatmul.mubr.f32.gmra.mrb[0].mxu0 %v529
    %v1232 = vpop.f32.mrb[0].mxu0
    %v1233 = vadd.f32 0.0, %v1232
    %v1234 = vpop.f32.mrb[0].mxu0
    %1235 = vdwg.mxu0
    %1236 = vst [vmem:[#allocation2] sm:$0xff] %v598
    %1237 = vst [vmem:[#allocation2 + $0x8] sm:$0xff] %v603
    %1238 = vst [vmem:[#allocation2 + $0x10] sm:$0xff] %v608
    %1239 = vst [vmem:[#allocation2 + $0x18] sm:$0xff] %v613
    %1240 = vst [vmem:[#allocation2 + $0x20] sm:$0xff] %v618
    %1241 = vst [vmem:[#allocation2 + $0x28] sm:$0xff] %v623
    %1242 = vst [vmem:[#allocation2 + $0x30] sm:$0xff] %v628
    %1243 = vst [vmem:[#allocation2 + $0x38] sm:$0xff] %v633
    %1244 = vst [vmem:[#allocation2 + $0x40] sm:$0xff] %v638
    %1245 = vst [vmem:[#allocation2 + $0x48] sm:$0xff] %v643
    %1246 = vst [vmem:[#allocation2 + $0x50] sm:$0xff] %v648
    %1247 = vst [vmem:[#allocation2 + $0x58] sm:$0xff] %v653
    %1248 = vst [vmem:[#allocation2 + $0x60] sm:$0xff] %v658
    %1249 = vst [vmem:[#allocation2 + $0x68] sm:$0xff] %v663
    %1250 = vst [vmem:[#allocation2 + $0x70] sm:$0xff] %v668
    %1251 = vst [vmem:[#allocation2 + $0x78] sm:$0xff] %v673
    %1252 = vst [vmem:[#allocation2 + $0x80] sm:$0xff] %v678
    %1253 = vst [vmem:[#allocation2 + $0x88] sm:$0xff] %v683
    %1254 = vst [vmem:[#allocation2 + $0x90] sm:$0xff] %v688
    %1255 = vst [vmem:[#allocation2 + $0x98] sm:$0xff] %v693
    %1256 = vst [vmem:[#allocation2 + $0xa0] sm:$0xff] %v698
    %1257 = vst [vmem:[#allocation2 + $0xa8] sm:$0xff] %v703
    %1258 = vst [vmem:[#allocation2 + $0xb0] sm:$0xff] %v708
    %1259 = vst [vmem:[#allocation2 + $0xb8] sm:$0xff] %v713
    %1260 = vst [vmem:[#allocation2 + $0xc0] sm:$0xff] %v718
    %1261 = vst [vmem:[#allocation2 + $0xc8] sm:$0xff] %v723
    %1262 = vst [vmem:[#allocation2 + $0xd0] sm:$0xff] %v728
    %1263 = vst [vmem:[#allocation2 + $0xd8] sm:$0xff] %v733
    %1264 = vst [vmem:[#allocation2 + $0xe0] sm:$0xff] %v738
    %1265 = vst [vmem:[#allocation2 + $0xe8] sm:$0xff] %v743
    %1266 = vst [vmem:[#allocation2 + $0xf0] sm:$0xff] %v748
    %1267 = vst [vmem:[#allocation2 + $0xf8] sm:$0xff] %v753
    %1268 = vst [vmem:[#allocation2 + $0x100] sm:$0xff] %v758
    %1269 = vst [vmem:[#allocation2 + $0x108] sm:$0xff] %v763
    %1270 = vst [vmem:[#allocation2 + $0x110] sm:$0xff] %v768
    %1271 = vst [vmem:[#allocation2 + $0x118] sm:$0xff] %v773
    %1272 = vst [vmem:[#allocation2 + $0x120] sm:$0xff] %v778
    %1273 = vst [vmem:[#allocation2 + $0x128] sm:$0xff] %v783
    %1274 = vst [vmem:[#allocation2 + $0x130] sm:$0xff] %v788
    %1275 = vst [vmem:[#allocation2 + $0x138] sm:$0xff] %v793
    %1276 = vst [vmem:[#allocation2 + $0x140] sm:$0xff] %v798
    %1277 = vst [vmem:[#allocation2 + $0x148] sm:$0xff] %v803
    %1278 = vst [vmem:[#allocation2 + $0x150] sm:$0xff] %v808
    %1279 = vst [vmem:[#allocation2 + $0x158] sm:$0xff] %v813
    %1280 = vst [vmem:[#allocation2 + $0x160] sm:$0xff] %v818
    %1281 = vst [vmem:[#allocation2 + $0x168] sm:$0xff] %v823
    %1282 = vst [vmem:[#allocation2 + $0x170] sm:$0xff] %v828
    %1283 = vst [vmem:[#allocation2 + $0x178] sm:$0xff] %v833
    %1284 = vst [vmem:[#allocation2 + $0x180] sm:$0xff] %v838
    %1285 = vst [vmem:[#allocation2 + $0x188] sm:$0xff] %v843
    %1286 = vst [vmem:[#allocation2 + $0x190] sm:$0xff] %v848
    %1287 = vst [vmem:[#allocation2 + $0x198] sm:$0xff] %v853
    %1288 = vst [vmem:[#allocation2 + $0x1a0] sm:$0xff] %v858
    %1289 = vst [vmem:[#allocation2 + $0x1a8] sm:$0xff] %v863
    %1290 = vst [vmem:[#allocation2 + $0x1b0] sm:$0xff] %v868
    %1291 = vst [vmem:[#allocation2 + $0x1b8] sm:$0xff] %v873
    %1292 = vst [vmem:[#allocation2 + $0x1c0] sm:$0xff] %v878
    %1293 = vst [vmem:[#allocation2 + $0x1c8] sm:$0xff] %v883
    %1294 = vst [vmem:[#allocation2 + $0x1d0] sm:$0xff] %v888
    %1295 = vst [vmem:[#allocation2 + $0x1d8] sm:$0xff] %v893
    %1296 = vst [vmem:[#allocation2 + $0x1e0] sm:$0xff] %v898
    %1297 = vst [vmem:[#allocation2 + $0x1e8] sm:$0xff] %v903
    %1298 = vst [vmem:[#allocation2 + $0x1f0] sm:$0xff] %v908
    %1299 = vst [vmem:[#allocation2 + $0x1f8] sm:$0xff] %v913
    %1300 = vst [vmem:[#allocation2 + $0x200] sm:$0xff] %v918
    %1301 = vst [vmem:[#allocation2 + $0x208] sm:$0xff] %v923
    %1302 = vst [vmem:[#allocation2 + $0x210] sm:$0xff] %v928
    %1303 = vst [vmem:[#allocation2 + $0x218] sm:$0xff] %v933
    %1304 = vst [vmem:[#allocation2 + $0x220] sm:$0xff] %v938
    %1305 = vst [vmem:[#allocation2 + $0x228] sm:$0xff] %v943
    %1306 = vst [vmem:[#allocation2 + $0x230] sm:$0xff] %v948
    %1307 = vst [vmem:[#allocation2 + $0x238] sm:$0xff] %v953
    %1308 = vst [vmem:[#allocation2 + $0x240] sm:$0xff] %v958
    %1309 = vst [vmem:[#allocation2 + $0x248] sm:$0xff] %v963
    %1310 = vst [vmem:[#allocation2 + $0x250] sm:$0xff] %v968
    %1311 = vst [vmem:[#allocation2 + $0x258] sm:$0xff] %v973
    %1312 = vst [vmem:[#allocation2 + $0x260] sm:$0xff] %v978
    %1313 = vst [vmem:[#allocation2 + $0x268] sm:$0xff] %v983
    %1314 = vst [vmem:[#allocation2 + $0x270] sm:$0xff] %v988
    %1315 = vst [vmem:[#allocation2 + $0x278] sm:$0xff] %v993
    %1316 = vst [vmem:[#allocation2 + $0x280] sm:$0xff] %v998
    %1317 = vst [vmem:[#allocation2 + $0x288] sm:$0xff] %v1003
    %1318 = vst [vmem:[#allocation2 + $0x290] sm:$0xff] %v1008
    %1319 = vst [vmem:[#allocation2 + $0x298] sm:$0xff] %v1013
    %1320 = vst [vmem:[#allocation2 + $0x2a0] sm:$0xff] %v1018
    %1321 = vst [vmem:[#allocation2 + $0x2a8] sm:$0xff] %v1023
    %1322 = vst [vmem:[#allocation2 + $0x2b0] sm:$0xff] %v1028
    %1323 = vst [vmem:[#allocation2 + $0x2b8] sm:$0xff] %v1033
    %1324 = vst [vmem:[#allocation2 + $0x2c0] sm:$0xff] %v1038
    %1325 = vst [vmem:[#allocation2 + $0x2c8] sm:$0xff] %v1043
    %1326 = vst [vmem:[#allocation2 + $0x2d0] sm:$0xff] %v1048
    %1327 = vst [vmem:[#allocation2 + $0x2d8] sm:$0xff] %v1053
    %1328 = vst [vmem:[#allocation2 + $0x2e0] sm:$0xff] %v1058
    %1329 = vst [vmem:[#allocation2 + $0x2e8] sm:$0xff] %v1063
    %1330 = vst [vmem:[#allocation2 + $0x2f0] sm:$0xff] %v1068
    %1331 = vst [vmem:[#allocation2 + $0x2f8] sm:$0xff] %v1073
    %1332 = vst [vmem:[#allocation2 + $0x300] sm:$0xff] %v1078
    %1333 = vst [vmem:[#allocation2 + $0x308] sm:$0xff] %v1083
    %1334 = vst [vmem:[#allocation2 + $0x310] sm:$0xff] %v1088
    %1335 = vst [vmem:[#allocation2 + $0x318] sm:$0xff] %v1093
    %1336 = vst [vmem:[#allocation2 + $0x320] sm:$0xff] %v1098
    %1337 = vst [vmem:[#allocation2 + $0x328] sm:$0xff] %v1103
    %1338 = vst [vmem:[#allocation2 + $0x330] sm:$0xff] %v1108
    %1339 = vst [vmem:[#allocation2 + $0x338] sm:$0xff] %v1113
    %1340 = vst [vmem:[#allocation2 + $0x340] sm:$0xff] %v1118
    %1341 = vst [vmem:[#allocation2 + $0x348] sm:$0xff] %v1123
    %1342 = vst [vmem:[#allocation2 + $0x350] sm:$0xff] %v1128
    %1343 = vst [vmem:[#allocation2 + $0x358] sm:$0xff] %v1133
    %1344 = vst [vmem:[#allocation2 + $0x360] sm:$0xff] %v1138
    %1345 = vst [vmem:[#allocation2 + $0x368] sm:$0xff] %v1143
    %1346 = vst [vmem:[#allocation2 + $0x370] sm:$0xff] %v1148
    %1347 = vst [vmem:[#allocation2 + $0x378] sm:$0xff] %v1153
    %1348 = vst [vmem:[#allocation2 + $0x380] sm:$0xff] %v1158
    %1349 = vst [vmem:[#allocation2 + $0x388] sm:$0xff] %v1163
    %1350 = vst [vmem:[#allocation2 + $0x390] sm:$0xff] %v1168
    %1351 = vst [vmem:[#allocation2 + $0x398] sm:$0xff] %v1173
    %1352 = vst [vmem:[#allocation2 + $0x3a0] sm:$0xff] %v1178
    %1353 = vst [vmem:[#allocation2 + $0x3a8] sm:$0xff] %v1183
    %1354 = vst [vmem:[#allocation2 + $0x3b0] sm:$0xff] %v1188
    %1355 = vst [vmem:[#allocation2 + $0x3b8] sm:$0xff] %v1193
    %1356 = vst [vmem:[#allocation2 + $0x3c0] sm:$0xff] %v1198
    %1357 = vst [vmem:[#allocation2 + $0x3c8] sm:$0xff] %v1203
    %1358 = vst [vmem:[#allocation2 + $0x3d0] sm:$0xff] %v1208
    %1359 = vst [vmem:[#allocation2 + $0x3d8] sm:$0xff] %v1213
    %1360 = vst [vmem:[#allocation2 + $0x3e0] sm:$0xff] %v1218
    %1361 = vst [vmem:[#allocation2 + $0x3e8] sm:$0xff] %v1223
    %1362 = vst [vmem:[#allocation2 + $0x3f0] sm:$0xff] %v1228
    %1363 = vst [vmem:[#allocation2 + $0x3f8] sm:$0xff] %v1233
    %v1364 = vld [vmem:[%s2] sm:$0xff]
    %v1365 = vld [vmem:[%s2 + $0x8] sm:$0xff]
    %v1366 = vld [vmem:[%s2 + $0x10] sm:$0xff]
    %v1367 = vld [vmem:[%s2 + $0x18] sm:$0xff]
    %v1368 = vld [vmem:[%s2 + $0x20] sm:$0xff]
    %v1369 = vld [vmem:[%s2 + $0x28] sm:$0xff]
    %v1370 = vld [vmem:[%s2 + $0x30] sm:$0xff]
    %v1371 = vld [vmem:[%s2 + $0x38] sm:$0xff]
    %v1372 = vld [vmem:[%s2 + $0x40] sm:$0xff]
    %v1373 = vld [vmem:[%s2 + $0x48] sm:$0xff]
    %v1374 = vld [vmem:[%s2 + $0x50] sm:$0xff]
    %v1375 = vld [vmem:[%s2 + $0x58] sm:$0xff]
    %v1376 = vld [vmem:[%s2 + $0x60] sm:$0xff]
    %v1377 = vld [vmem:[%s2 + $0x68] sm:$0xff]
    %v1378 = vld [vmem:[%s2 + $0x70] sm:$0xff]
    %v1379 = vld [vmem:[%s2 + $0x78] sm:$0xff]
    %1380 = vmatprep.subr.mxu0 0.0
    %1381 = vmatpush1.msra.mxu0 %v1364
    %1382 = vmatprep.subr.mxu0 0.0
    %1383 = vmatpush1.msra.mxu0 %v1365
    %1384 = vmatprep.subr.mxu0 0.0
    %1385 = vmatpush1.msra.mxu0 %v1366
    %1386 = vmatprep.subr.mxu0 0.0
    %1387 = vmatpush1.msra.mxu0 %v1367
    %1388 = vmatprep.subr.mxu0 0.0
    %1389 = vmatpush1.msra.mxu0 %v1368
    %1390 = vmatprep.subr.mxu0 0.0
    %1391 = vmatpush1.msra.mxu0 %v1369
    %1392 = vmatprep.subr.mxu0 0.0
    %1393 = vmatpush1.msra.mxu0 %v1370
    %1394 = vmatprep.subr.mxu0 0.0
    %1395 = vmatpush1.msra.mxu0 %v1371
    %1396 = vmatprep.subr.mxu0 0.0
    %1397 = vmatpush1.msra.mxu0 %v1372
    %1398 = vmatprep.subr.mxu0 0.0
    %1399 = vmatpush1.msra.mxu0 %v1373
    %1400 = vmatprep.subr.mxu0 0.0
    %1401 = vmatpush1.msra.mxu0 %v1374
    %1402 = vmatprep.subr.mxu0 0.0
    %1403 = vmatpush1.msra.mxu0 %v1375
    %1404 = vmatprep.subr.mxu0 0.0
    %1405 = vmatpush1.msra.mxu0 %v1376
    %1406 = vmatprep.subr.mxu0 0.0
    %1407 = vmatpush1.msra.mxu0 %v1377
    %1408 = vmatprep.subr.mxu0 0.0
    %1409 = vmatpush1.msra.mxu0 %v1378
    %1410 = vmatprep.subr.mxu0 0.0
    %1411 = vmatpush1.msra.mxu0 %v1379
    %1412 = vmatprep.subr.mxu0 0.0
    %1413 = vmatpush1.msra.mxu0 0.0
    %1414 = vmatprep.subr.mxu0 0.0
    %1415 = vmatpush1.msra.mxu0 0.0
    %1416 = vmatprep.subr.mxu0 0.0
    %1417 = vmatpush1.msra.mxu0 0.0
    %1418 = vmatprep.subr.mxu0 0.0
    %1419 = vmatpush1.msra.mxu0 0.0
    %1420 = vmatprep.subr.mxu0 0.0
    %1421 = vmatpush1.msra.mxu0 0.0
    %1422 = vmatprep.subr.mxu0 0.0
    %1423 = vmatpush1.msra.mxu0 0.0
    %1424 = vmatprep.subr.mxu0 0.0
    %1425 = vmatpush1.msra.mxu0 0.0
    %1426 = vmatprep.subr.mxu0 0.0
    %1427 = vmatpush1.msra.mxu0 0.0
    %1428 = vmatprep.subr.mxu0 0.0
    %1429 = vmatpush1.msra.mxu0 0.0
    %1430 = vmatprep.subr.mxu0 0.0
    %1431 = vmatpush1.msra.mxu0 0.0
    %1432 = vmatprep.subr.mxu0 0.0
    %1433 = vmatpush1.msra.mxu0 0.0
    %1434 = vmatprep.subr.mxu0 0.0
    %1435 = vmatpush1.msra.mxu0 0.0
    %1436 = vmatprep.subr.mxu0 0.0
    %1437 = vmatpush1.msra.mxu0 0.0
    %1438 = vmatprep.subr.mxu0 0.0
    %1439 = vmatpush1.msra.mxu0 0.0
    %1440 = vmatprep.subr.mxu0 0.0
    %1441 = vmatpush1.msra.mxu0 0.0
    %1442 = vmatprep.subr.mxu0 0.0
    %1443 = vmatpush1.msra.mxu0 0.0
    %1444 = vmatprep.mubr.f32.mxu0 0.0
    %1445 = vmatmul.mubr.f32.gmra.mrb[0].mxu0 %v598
    %v1446 = vpop.f32.mrb[0].mxu0
    %v1447 = vadd.f32 0.0, %v1446
    %v1448 = vpop.f32.mrb[0].mxu0
    %1449 = vmatprep.mubr.f32.mxu0 0.0
    %1450 = vmatmul.mubr.f32.gmra.mrb[0].mxu0 %v603
    %v1451 = vpop.f32.mrb[0].mxu0
    %v1452 = vadd.f32 0.0, %v1451
    %v1453 = vpop.f32.mrb[0].mxu0
    %1454 = vmatprep.mubr.f32.mxu0 0.0
    %1455 = vmatmul.mubr.f32.gmra.mrb[0].mxu0 %v608
    %v1456 = vpop.f32.mrb[0].mxu0
    %v1457 = vadd.f32 0.0, %v1456
    %v1458 = vpop.f32.mrb[0].mxu0
    %1459 = vmatprep.mubr.f32.mxu0 0.0
    %1460 = vmatmul.mubr.f32.gmra.mrb[0].mxu0 %v613
    %v1461 = vpop.f32.mrb[0].mxu0
    %v1462 = vadd.f32 0.0, %v1461
    %v1463 = vpop.f32.mrb[0].mxu0
    %1464 = vmatprep.mubr.f32.mxu0 0.0
    %1465 = vmatmul.mubr.f32.gmra.mrb[0].mxu0 %v618
    %v1466 = vpop.f32.mrb[0].mxu0
    %v1467 = vadd.f32 0.0, %v1466
    %v1468 = vpop.f32.mrb[0].mxu0
    %1469 = vmatprep.mubr.f32.mxu0 0.0
    %1470 = vmatmul.mubr.f32.gmra.mrb[0].mxu0 %v623
    %v1471 = vpop.f32.mrb[0].mxu0
    %v1472 = vadd.f32 0.0, %v1471
    %v1473 = vpop.f32.mrb[0].mxu0
    %1474 = vmatprep.mubr.f32.mxu0 0.0
    %1475 = vmatmul.mubr.f32.gmra.mrb[0].mxu0 %v628
    %v1476 = vpop.f32.mrb[0].mxu0
    %v1477 = vadd.f32 0.0, %v1476
    %v1478 = vpop.f32.mrb[0].mxu0
    %1479 = vmatprep.mubr.f32.mxu0 0.0
    %1480 = vmatmul.mubr.f32.gmra.mrb[0].mxu0 %v633
    %v1481 = vpop.f32.mrb[0].mxu0
    %v1482 = vadd.f32 0.0, %v1481
    %v1483 = vpop.f32.mrb[0].mxu0
    %1484 = vmatprep.mubr.f32.mxu0 0.0
    %1485 = vmatmul.mubr.f32.gmra.mrb[0].mxu0 %v638
    %v1486 = vpop.f32.mrb[0].mxu0
    %v1487 = vadd.f32 0.0, %v1486
    %v1488 = vpop.f32.mrb[0].mxu0
    %1489 = vmatprep.mubr.f32.mxu0 0.0
    %1490 = vmatmul.mubr.f32.gmra.mrb[0].mxu0 %v643
    %v1491 = vpop.f32.mrb[0].mxu0
    %v1492 = vadd.f32 0.0, %v1491
    %v1493 = vpop.f32.mrb[0].mxu0
    %1494 = vmatprep.mubr.f32.mxu0 0.0
    %1495 = vmatmul.mubr.f32.gmra.mrb[0].mxu0 %v648
    %v1496 = vpop.f32.mrb[0].mxu0
    %v1497 = vadd.f32 0.0, %v1496
    %v1498 = vpop.f32.mrb[0].mxu0
    %1499 = vmatprep.mubr.f32.mxu0 0.0
    %1500 = vmatmul.mubr.f32.gmra.mrb[0].mxu0 %v653
    %v1501 = vpop.f32.mrb[0].mxu0
    %v1502 = vadd.f32 0.0, %v1501
    %v1503 = vpop.f32.mrb[0].mxu0
    %1504 = vmatprep.mubr.f32.mxu0 0.0
    %1505 = vmatmul.mubr.f32.gmra.mrb[0].mxu0 %v658
    %v1506 = vpop.f32.mrb[0].mxu0
    %v1507 = vadd.f32 0.0, %v1506
    %v1508 = vpop.f32.mrb[0].mxu0
    %1509 = vmatprep.mubr.f32.mxu0 0.0
    %1510 = vmatmul.mubr.f32.gmra.mrb[0].mxu0 %v663
    %v1511 = vpop.f32.mrb[0].mxu0
    %v1512 = vadd.f32 0.0, %v1511
    %v1513 = vpop.f32.mrb[0].mxu0
    %1514 = vmatprep.mubr.f32.mxu0 0.0
    %1515 = vmatmul.mubr.f32.gmra.mrb[0].mxu0 %v668
    %v1516 = vpop.f32.mrb[0].mxu0
    %v1517 = vadd.f32 0.0, %v1516
    %v1518 = vpop.f32.mrb[0].mxu0
    %1519 = vmatprep.mubr.f32.mxu0 0.0
    %1520 = vmatmul.mubr.f32.gmra.mrb[0].mxu0 %v673
    %v1521 = vpop.f32.mrb[0].mxu0
    %v1522 = vadd.f32 0.0, %v1521
    %v1523 = vpop.f32.mrb[0].mxu0
    %1524 = vmatprep.mubr.f32.mxu0 0.0
    %1525 = vmatmul.mubr.f32.gmra.mrb[0].mxu0 %v678
    %v1526 = vpop.f32.mrb[0].mxu0
    %v1527 = vadd.f32 0.0, %v1526
    %v1528 = vpop.f32.mrb[0].mxu0
    %1529 = vmatprep.mubr.f32.mxu0 0.0
    %1530 = vmatmul.mubr.f32.gmra.mrb[0].mxu0 %v683
    %v1531 = vpop.f32.mrb[0].mxu0
    %v1532 = vadd.f32 0.0, %v1531
    %v1533 = vpop.f32.mrb[0].mxu0
    %1534 = vmatprep.mubr.f32.mxu0 0.0
    %1535 = vmatmul.mubr.f32.gmra.mrb[0].mxu0 %v688
    %v1536 = vpop.f32.mrb[0].mxu0
    %v1537 = vadd.f32 0.0, %v1536
    %v1538 = vpop.f32.mrb[0].mxu0
    %1539 = vmatprep.mubr.f32.mxu0 0.0
    %1540 = vmatmul.mubr.f32.gmra.mrb[0].mxu0 %v693
    %v1541 = vpop.f32.mrb[0].mxu0
    %v1542 = vadd.f32 0.0, %v1541
    %v1543 = vpop.f32.mrb[0].mxu0
    %1544 = vmatprep.mubr.f32.mxu0 0.0
    %1545 = vmatmul.mubr.f32.gmra.mrb[0].mxu0 %v698
    %v1546 = vpop.f32.mrb[0].mxu0
    %v1547 = vadd.f32 0.0, %v1546
    %v1548 = vpop.f32.mrb[0].mxu0
    %1549 = vmatprep.mubr.f32.mxu0 0.0
    %1550 = vmatmul.mubr.f32.gmra.mrb[0].mxu0 %v703
    %v1551 = vpop.f32.mrb[0].mxu0
    %v1552 = vadd.f32 0.0, %v1551
    %v1553 = vpop.f32.mrb[0].mxu0
    %1554 = vmatprep.mubr.f32.mxu0 0.0
    %1555 = vmatmul.mubr.f32.gmra.mrb[0].mxu0 %v708
    %v1556 = vpop.f32.mrb[0].mxu0
    %v1557 = vadd.f32 0.0, %v1556
    %v1558 = vpop.f32.mrb[0].mxu0
    %1559 = vmatprep.mubr.f32.mxu0 0.0
    %1560 = vmatmul.mubr.f32.gmra.mrb[0].mxu0 %v713
    %v1561 = vpop.f32.mrb[0].mxu0
    %v1562 = vadd.f32 0.0, %v1561
    %v1563 = vpop.f32.mrb[0].mxu0
    %1564 = vmatprep.mubr.f32.mxu0 0.0
    %1565 = vmatmul.mubr.f32.gmra.mrb[0].mxu0 %v718
    %v1566 = vpop.f32.mrb[0].mxu0
    %v1567 = vadd.f32 0.0, %v1566
    %v1568 = vpop.f32.mrb[0].mxu0
    %1569 = vmatprep.mubr.f32.mxu0 0.0
    %1570 = vmatmul.mubr.f32.gmra.mrb[0].mxu0 %v723
    %v1571 = vpop.f32.mrb[0].mxu0
    %v1572 = vadd.f32 0.0, %v1571
    %v1573 = vpop.f32.mrb[0].mxu0
    %1574 = vmatprep.mubr.f32.mxu0 0.0
    %1575 = vmatmul.mubr.f32.gmra.mrb[0].mxu0 %v728
    %v1576 = vpop.f32.mrb[0].mxu0
    %v1577 = vadd.f32 0.0, %v1576
    %v1578 = vpop.f32.mrb[0].mxu0
    %1579 = vmatprep.mubr.f32.mxu0 0.0
    %1580 = vmatmul.mubr.f32.gmra.mrb[0].mxu0 %v733
    %v1581 = vpop.f32.mrb[0].mxu0
    %v1582 = vadd.f32 0.0, %v1581
    %v1583 = vpop.f32.mrb[0].mxu0
    %1584 = vmatprep.mubr.f32.mxu0 0.0
    %1585 = vmatmul.mubr.f32.gmra.mrb[0].mxu0 %v738
    %v1586 = vpop.f32.mrb[0].mxu0
    %v1587 = vadd.f32 0.0, %v1586
    %v1588 = vpop.f32.mrb[0].mxu0
    %1589 = vmatprep.mubr.f32.mxu0 0.0
    %1590 = vmatmul.mubr.f32.gmra.mrb[0].mxu0 %v743
    %v1591 = vpop.f32.mrb[0].mxu0
    %v1592 = vadd.f32 0.0, %v1591
    %v1593 = vpop.f32.mrb[0].mxu0
    %1594 = vmatprep.mubr.f32.mxu0 0.0
    %1595 = vmatmul.mubr.f32.gmra.mrb[0].mxu0 %v748
    %v1596 = vpop.f32.mrb[0].mxu0
    %v1597 = vadd.f32 0.0, %v1596
    %v1598 = vpop.f32.mrb[0].mxu0
    %1599 = vmatprep.mubr.f32.mxu0 0.0
    %1600 = vmatmul.mubr.f32.gmra.mrb[0].mxu0 %v753
    %v1601 = vpop.f32.mrb[0].mxu0
    %v1602 = vadd.f32 0.0, %v1601
    %v1603 = vpop.f32.mrb[0].mxu0
    %1604 = vmatprep.mubr.f32.mxu0 0.0
    %1605 = vmatmul.mubr.f32.gmra.mrb[0].mxu0 %v758
    %v1606 = vpop.f32.mrb[0].mxu0
    %v1607 = vadd.f32 0.0, %v1606
    %v1608 = vpop.f32.mrb[0].mxu0
    %1609 = vmatprep.mubr.f32.mxu0 0.0
    %1610 = vmatmul.mubr.f32.gmra.mrb[0].mxu0 %v763
    %v1611 = vpop.f32.mrb[0].mxu0
    %v1612 = vadd.f32 0.0, %v1611
    %v1613 = vpop.f32.mrb[0].mxu0
    %1614 = vmatprep.mubr.f32.mxu0 0.0
    %1615 = vmatmul.mubr.f32.gmra.mrb[0].mxu0 %v768
    %v1616 = vpop.f32.mrb[0].mxu0
    %v1617 = vadd.f32 0.0, %v1616
    %v1618 = vpop.f32.mrb[0].mxu0
    %1619 = vmatprep.mubr.f32.mxu0 0.0
    %1620 = vmatmul.mubr.f32.gmra.mrb[0].mxu0 %v773
    %v1621 = vpop.f32.mrb[0].mxu0
    %v1622 = vadd.f32 0.0, %v1621
    %v1623 = vpop.f32.mrb[0].mxu0
    %1624 = vmatprep.mubr.f32.mxu0 0.0
    %1625 = vmatmul.mubr.f32.gmra.mrb[0].mxu0 %v778
    %v1626 = vpop.f32.mrb[0].mxu0
    %v1627 = vadd.f32 0.0, %v1626
    %v1628 = vpop.f32.mrb[0].mxu0
    %1629 = vmatprep.mubr.f32.mxu0 0.0
    %1630 = vmatmul.mubr.f32.gmra.mrb[0].mxu0 %v783
    %v1631 = vpop.f32.mrb[0].mxu0
    %v1632 = vadd.f32 0.0, %v1631
    %v1633 = vpop.f32.mrb[0].mxu0
    %1634 = vmatprep.mubr.f32.mxu0 0.0
    %1635 = vmatmul.mubr.f32.gmra.mrb[0].mxu0 %v788
    %v1636 = vpop.f32.mrb[0].mxu0
    %v1637 = vadd.f32 0.0, %v1636
    %v1638 = vpop.f32.mrb[0].mxu0
    %1639 = vmatprep.mubr.f32.mxu0 0.0
    %1640 = vmatmul.mubr.f32.gmra.mrb[0].mxu0 %v793
    %v1641 = vpop.f32.mrb[0].mxu0
    %v1642 = vadd.f32 0.0, %v1641
    %v1643 = vpop.f32.mrb[0].mxu0
    %1644 = vmatprep.mubr.f32.mxu0 0.0
    %1645 = vmatmul.mubr.f32.gmra.mrb[0].mxu0 %v798
    %v1646 = vpop.f32.mrb[0].mxu0
    %v1647 = vadd.f32 0.0, %v1646
    %v1648 = vpop.f32.mrb[0].mxu0
    %1649 = vmatprep.mubr.f32.mxu0 0.0
    %1650 = vmatmul.mubr.f32.gmra.mrb[0].mxu0 %v803
    %v1651 = vpop.f32.mrb[0].mxu0
    %v1652 = vadd.f32 0.0, %v1651
    %v1653 = vpop.f32.mrb[0].mxu0
    %1654 = vmatprep.mubr.f32.mxu0 0.0
    %1655 = vmatmul.mubr.f32.gmra.mrb[0].mxu0 %v808
    %v1656 = vpop.f32.mrb[0].mxu0
    %v1657 = vadd.f32 0.0, %v1656
    %v1658 = vpop.f32.mrb[0].mxu0
    %1659 = vmatprep.mubr.f32.mxu0 0.0
    %1660 = vmatmul.mubr.f32.gmra.mrb[0].mxu0 %v813
    %v1661 = vpop.f32.mrb[0].mxu0
    %v1662 = vadd.f32 0.0, %v1661
    %v1663 = vpop.f32.mrb[0].mxu0
    %1664 = vmatprep.mubr.f32.mxu0 0.0
    %1665 = vmatmul.mubr.f32.gmra.mrb[0].mxu0 %v818
    %v1666 = vpop.f32.mrb[0].mxu0
    %v1667 = vadd.f32 0.0, %v1666
    %v1668 = vpop.f32.mrb[0].mxu0
    %1669 = vmatprep.mubr.f32.mxu0 0.0
    %1670 = vmatmul.mubr.f32.gmra.mrb[0].mxu0 %v823
    %v1671 = vpop.f32.mrb[0].mxu0
    %v1672 = vadd.f32 0.0, %v1671
    %v1673 = vpop.f32.mrb[0].mxu0
    %1674 = vmatprep.mubr.f32.mxu0 0.0
    %1675 = vmatmul.mubr.f32.gmra.mrb[0].mxu0 %v828
    %v1676 = vpop.f32.mrb[0].mxu0
    %v1677 = vadd.f32 0.0, %v1676
    %v1678 = vpop.f32.mrb[0].mxu0
    %1679 = vmatprep.mubr.f32.mxu0 0.0
    %1680 = vmatmul.mubr.f32.gmra.mrb[0].mxu0 %v833
    %v1681 = vpop.f32.mrb[0].mxu0
    %v1682 = vadd.f32 0.0, %v1681
    %v1683 = vpop.f32.mrb[0].mxu0
    %1684 = vmatprep.mubr.f32.mxu0 0.0
    %1685 = vmatmul.mubr.f32.gmra.mrb[0].mxu0 %v838
    %v1686 = vpop.f32.mrb[0].mxu0
    %v1687 = vadd.f32 0.0, %v1686
    %v1688 = vpop.f32.mrb[0].mxu0
    %1689 = vmatprep.mubr.f32.mxu0 0.0
    %1690 = vmatmul.mubr.f32.gmra.mrb[0].mxu0 %v843
    %v1691 = vpop.f32.mrb[0].mxu0
    %v1692 = vadd.f32 0.0, %v1691
    %v1693 = vpop.f32.mrb[0].mxu0
    %1694 = vmatprep.mubr.f32.mxu0 0.0
    %1695 = vmatmul.mubr.f32.gmra.mrb[0].mxu0 %v848
    %v1696 = vpop.f32.mrb[0].mxu0
    %v1697 = vadd.f32 0.0, %v1696
    %v1698 = vpop.f32.mrb[0].mxu0
    %1699 = vmatprep.mubr.f32.mxu0 0.0
    %1700 = vmatmul.mubr.f32.gmra.mrb[0].mxu0 %v853
    %v1701 = vpop.f32.mrb[0].mxu0
    %v1702 = vadd.f32 0.0, %v1701
    %v1703 = vpop.f32.mrb[0].mxu0
    %1704 = vmatprep.mubr.f32.mxu0 0.0
    %1705 = vmatmul.mubr.f32.gmra.mrb[0].mxu0 %v858
    %v1706 = vpop.f32.mrb[0].mxu0
    %v1707 = vadd.f32 0.0, %v1706
    %v1708 = vpop.f32.mrb[0].mxu0
    %1709 = vmatprep.mubr.f32.mxu0 0.0
    %1710 = vmatmul.mubr.f32.gmra.mrb[0].mxu0 %v863
    %v1711 = vpop.f32.mrb[0].mxu0
    %v1712 = vadd.f32 0.0, %v1711
    %v1713 = vpop.f32.mrb[0].mxu0
    %1714 = vmatprep.mubr.f32.mxu0 0.0
    %1715 = vmatmul.mubr.f32.gmra.mrb[0].mxu0 %v868
    %v1716 = vpop.f32.mrb[0].mxu0
    %v1717 = vadd.f32 0.0, %v1716
    %v1718 = vpop.f32.mrb[0].mxu0
    %1719 = vmatprep.mubr.f32.mxu0 0.0
    %1720 = vmatmul.mubr.f32.gmra.mrb[0].mxu0 %v873
    %v1721 = vpop.f32.mrb[0].mxu0
    %v1722 = vadd.f32 0.0, %v1721
    %v1723 = vpop.f32.mrb[0].mxu0
    %1724 = vmatprep.mubr.f32.mxu0 0.0
    %1725 = vmatmul.mubr.f32.gmra.mrb[0].mxu0 %v878
    %v1726 = vpop.f32.mrb[0].mxu0
    %v1727 = vadd.f32 0.0, %v1726
    %v1728 = vpop.f32.mrb[0].mxu0
    %1729 = vmatprep.mubr.f32.mxu0 0.0
    %1730 = vmatmul.mubr.f32.gmra.mrb[0].mxu0 %v883
    %v1731 = vpop.f32.mrb[0].mxu0
    %v1732 = vadd.f32 0.0, %v1731
    %v1733 = vpop.f32.mrb[0].mxu0
    %1734 = vmatprep.mubr.f32.mxu0 0.0
    %1735 = vmatmul.mubr.f32.gmra.mrb[0].mxu0 %v888
    %v1736 = vpop.f32.mrb[0].mxu0
    %v1737 = vadd.f32 0.0, %v1736
    %v1738 = vpop.f32.mrb[0].mxu0
    %1739 = vmatprep.mubr.f32.mxu0 0.0
    %1740 = vmatmul.mubr.f32.gmra.mrb[0].mxu0 %v893
    %v1741 = vpop.f32.mrb[0].mxu0
    %v1742 = vadd.f32 0.0, %v1741
    %v1743 = vpop.f32.mrb[0].mxu0
    %1744 = vmatprep.mubr.f32.mxu0 0.0
    %1745 = vmatmul.mubr.f32.gmra.mrb[0].mxu0 %v898
    %v1746 = vpop.f32.mrb[0].mxu0
    %v1747 = vadd.f32 0.0, %v1746
    %v1748 = vpop.f32.mrb[0].mxu0
    %1749 = vmatprep.mubr.f32.mxu0 0.0
    %1750 = vmatmul.mubr.f32.gmra.mrb[0].mxu0 %v903
    %v1751 = vpop.f32.mrb[0].mxu0
    %v1752 = vadd.f32 0.0, %v1751
    %v1753 = vpop.f32.mrb[0].mxu0
    %1754 = vmatprep.mubr.f32.mxu0 0.0
    %1755 = vmatmul.mubr.f32.gmra.mrb[0].mxu0 %v908
    %v1756 = vpop.f32.mrb[0].mxu0
    %v1757 = vadd.f32 0.0, %v1756
    %v1758 = vpop.f32.mrb[0].mxu0
    %1759 = vmatprep.mubr.f32.mxu0 0.0
    %1760 = vmatmul.mubr.f32.gmra.mrb[0].mxu0 %v913
    %v1761 = vpop.f32.mrb[0].mxu0
    %v1762 = vadd.f32 0.0, %v1761
    %v1763 = vpop.f32.mrb[0].mxu0
    %1764 = vmatprep.mubr.f32.mxu0 0.0
    %1765 = vmatmul.mubr.f32.gmra.mrb[0].mxu0 %v918
    %v1766 = vpop.f32.mrb[0].mxu0
    %v1767 = vadd.f32 0.0, %v1766
    %v1768 = vpop.f32.mrb[0].mxu0
    %1769 = vmatprep.mubr.f32.mxu0 0.0
    %1770 = vmatmul.mubr.f32.gmra.mrb[0].mxu0 %v923
    %v1771 = vpop.f32.mrb[0].mxu0
    %v1772 = vadd.f32 0.0, %v1771
    %v1773 = vpop.f32.mrb[0].mxu0
    %1774 = vmatprep.mubr.f32.mxu0 0.0
    %1775 = vmatmul.mubr.f32.gmra.mrb[0].mxu0 %v928
    %v1776 = vpop.f32.mrb[0].mxu0
    %v1777 = vadd.f32 0.0, %v1776
    %v1778 = vpop.f32.mrb[0].mxu0
    %1779 = vmatprep.mubr.f32.mxu0 0.0
    %1780 = vmatmul.mubr.f32.gmra.mrb[0].mxu0 %v933
    %v1781 = vpop.f32.mrb[0].mxu0
    %v1782 = vadd.f32 0.0, %v1781
    %v1783 = vpop.f32.mrb[0].mxu0
    %1784 = vmatprep.mubr.f32.mxu0 0.0
    %1785 = vmatmul.mubr.f32.gmra.mrb[0].mxu0 %v938
    %v1786 = vpop.f32.mrb[0].mxu0
    %v1787 = vadd.f32 0.0, %v1786
    %v1788 = vpop.f32.mrb[0].mxu0
    %1789 = vmatprep.mubr.f32.mxu0 0.0
    %1790 = vmatmul.mubr.f32.gmra.mrb[0].mxu0 %v943
    %v1791 = vpop.f32.mrb[0].mxu0
    %v1792 = vadd.f32 0.0, %v1791
    %v1793 = vpop.f32.mrb[0].mxu0
    %1794 = vmatprep.mubr.f32.mxu0 0.0
    %1795 = vmatmul.mubr.f32.gmra.mrb[0].mxu0 %v948
    %v1796 = vpop.f32.mrb[0].mxu0
    %v1797 = vadd.f32 0.0, %v1796
    %v1798 = vpop.f32.mrb[0].mxu0
    %1799 = vmatprep.mubr.f32.mxu0 0.0
    %1800 = vmatmul.mubr.f32.gmra.mrb[0].mxu0 %v953
    %v1801 = vpop.f32.mrb[0].mxu0
    %v1802 = vadd.f32 0.0, %v1801
    %v1803 = vpop.f32.mrb[0].mxu0
    %1804 = vmatprep.mubr.f32.mxu0 0.0
    %1805 = vmatmul.mubr.f32.gmra.mrb[0].mxu0 %v958
    %v1806 = vpop.f32.mrb[0].mxu0
    %v1807 = vadd.f32 0.0, %v1806
    %v1808 = vpop.f32.mrb[0].mxu0
    %1809 = vmatprep.mubr.f32.mxu0 0.0
    %1810 = vmatmul.mubr.f32.gmra.mrb[0].mxu0 %v963
    %v1811 = vpop.f32.mrb[0].mxu0
    %v1812 = vadd.f32 0.0, %v1811
    %v1813 = vpop.f32.mrb[0].mxu0
    %1814 = vmatprep.mubr.f32.mxu0 0.0
    %1815 = vmatmul.mubr.f32.gmra.mrb[0].mxu0 %v968
    %v1816 = vpop.f32.mrb[0].mxu0
    %v1817 = vadd.f32 0.0, %v1816
    %v1818 = vpop.f32.mrb[0].mxu0
    %1819 = vmatprep.mubr.f32.mxu0 0.0
    %1820 = vmatmul.mubr.f32.gmra.mrb[0].mxu0 %v973
    %v1821 = vpop.f32.mrb[0].mxu0
    %v1822 = vadd.f32 0.0, %v1821
    %v1823 = vpop.f32.mrb[0].mxu0
    %1824 = vmatprep.mubr.f32.mxu0 0.0
    %1825 = vmatmul.mubr.f32.gmra.mrb[0].mxu0 %v978
    %v1826 = vpop.f32.mrb[0].mxu0
    %v1827 = vadd.f32 0.0, %v1826
    %v1828 = vpop.f32.mrb[0].mxu0
    %1829 = vmatprep.mubr.f32.mxu0 0.0
    %1830 = vmatmul.mubr.f32.gmra.mrb[0].mxu0 %v983
    %v1831 = vpop.f32.mrb[0].mxu0
    %v1832 = vadd.f32 0.0, %v1831
    %v1833 = vpop.f32.mrb[0].mxu0
    %1834 = vmatprep.mubr.f32.mxu0 0.0
    %1835 = vmatmul.mubr.f32.gmra.mrb[0].mxu0 %v988
    %v1836 = vpop.f32.mrb[0].mxu0
    %v1837 = vadd.f32 0.0, %v1836
    %v1838 = vpop.f32.mrb[0].mxu0
    %1839 = vmatprep.mubr.f32.mxu0 0.0
    %1840 = vmatmul.mubr.f32.gmra.mrb[0].mxu0 %v993
    %v1841 = vpop.f32.mrb[0].mxu0
    %v1842 = vadd.f32 0.0, %v1841
    %v1843 = vpop.f32.mrb[0].mxu0
    %1844 = vmatprep.mubr.f32.mxu0 0.0
    %1845 = vmatmul.mubr.f32.gmra.mrb[0].mxu0 %v998
    %v1846 = vpop.f32.mrb[0].mxu0
    %v1847 = vadd.f32 0.0, %v1846
    %v1848 = vpop.f32.mrb[0].mxu0
    %1849 = vmatprep.mubr.f32.mxu0 0.0
    %1850 = vmatmul.mubr.f32.gmra.mrb[0].mxu0 %v1003
    %v1851 = vpop.f32.mrb[0].mxu0
    %v1852 = vadd.f32 0.0, %v1851
    %v1853 = vpop.f32.mrb[0].mxu0
    %1854 = vmatprep.mubr.f32.mxu0 0.0
    %1855 = vmatmul.mubr.f32.gmra.mrb[0].mxu0 %v1008
    %v1856 = vpop.f32.mrb[0].mxu0
    %v1857 = vadd.f32 0.0, %v1856
    %v1858 = vpop.f32.mrb[0].mxu0
    %1859 = vmatprep.mubr.f32.mxu0 0.0
    %1860 = vmatmul.mubr.f32.gmra.mrb[0].mxu0 %v1013
    %v1861 = vpop.f32.mrb[0].mxu0
    %v1862 = vadd.f32 0.0, %v1861
    %v1863 = vpop.f32.mrb[0].mxu0
    %1864 = vmatprep.mubr.f32.mxu0 0.0
    %1865 = vmatmul.mubr.f32.gmra.mrb[0].mxu0 %v1018
    %v1866 = vpop.f32.mrb[0].mxu0
    %v1867 = vadd.f32 0.0, %v1866
    %v1868 = vpop.f32.mrb[0].mxu0
    %1869 = vmatprep.mubr.f32.mxu0 0.0
    %1870 = vmatmul.mubr.f32.gmra.mrb[0].mxu0 %v1023
    %v1871 = vpop.f32.mrb[0].mxu0
    %v1872 = vadd.f32 0.0, %v1871
    %v1873 = vpop.f32.mrb[0].mxu0
    %1874 = vmatprep.mubr.f32.mxu0 0.0
    %1875 = vmatmul.mubr.f32.gmra.mrb[0].mxu0 %v1028
    %v1876 = vpop.f32.mrb[0].mxu0
    %v1877 = vadd.f32 0.0, %v1876
    %v1878 = vpop.f32.mrb[0].mxu0
    %1879 = vmatprep.mubr.f32.mxu0 0.0
    %1880 = vmatmul.mubr.f32.gmra.mrb[0].mxu0 %v1033
    %v1881 = vpop.f32.mrb[0].mxu0
    %v1882 = vadd.f32 0.0, %v1881
    %v1883 = vpop.f32.mrb[0].mxu0
    %1884 = vmatprep.mubr.f32.mxu0 0.0
    %1885 = vmatmul.mubr.f32.gmra.mrb[0].mxu0 %v1038
    %v1886 = vpop.f32.mrb[0].mxu0
    %v1887 = vadd.f32 0.0, %v1886
    %v1888 = vpop.f32.mrb[0].mxu0
    %1889 = vmatprep.mubr.f32.mxu0 0.0
    %1890 = vmatmul.mubr.f32.gmra.mrb[0].mxu0 %v1043
    %v1891 = vpop.f32.mrb[0].mxu0
    %v1892 = vadd.f32 0.0, %v1891
    %v1893 = vpop.f32.mrb[0].mxu0
    %1894 = vmatprep.mubr.f32.mxu0 0.0
    %1895 = vmatmul.mubr.f32.gmra.mrb[0].mxu0 %v1048
    %v1896 = vpop.f32.mrb[0].mxu0
    %v1897 = vadd.f32 0.0, %v1896
    %v1898 = vpop.f32.mrb[0].mxu0
    %1899 = vmatprep.mubr.f32.mxu0 0.0
    %1900 = vmatmul.mubr.f32.gmra.mrb[0].mxu0 %v1053
    %v1901 = vpop.f32.mrb[0].mxu0
    %v1902 = vadd.f32 0.0, %v1901
    %v1903 = vpop.f32.mrb[0].mxu0
    %1904 = vmatprep.mubr.f32.mxu0 0.0
    %1905 = vmatmul.mubr.f32.gmra.mrb[0].mxu0 %v1058
    %v1906 = vpop.f32.mrb[0].mxu0
    %v1907 = vadd.f32 0.0, %v1906
    %v1908 = vpop.f32.mrb[0].mxu0
    %1909 = vmatprep.mubr.f32.mxu0 0.0
    %1910 = vmatmul.mubr.f32.gmra.mrb[0].mxu0 %v1063
    %v1911 = vpop.f32.mrb[0].mxu0
    %v1912 = vadd.f32 0.0, %v1911
    %v1913 = vpop.f32.mrb[0].mxu0
    %1914 = vmatprep.mubr.f32.mxu0 0.0
    %1915 = vmatmul.mubr.f32.gmra.mrb[0].mxu0 %v1068
    %v1916 = vpop.f32.mrb[0].mxu0
    %v1917 = vadd.f32 0.0, %v1916
    %v1918 = vpop.f32.mrb[0].mxu0
    %1919 = vmatprep.mubr.f32.mxu0 0.0
    %1920 = vmatmul.mubr.f32.gmra.mrb[0].mxu0 %v1073
    %v1921 = vpop.f32.mrb[0].mxu0
    %v1922 = vadd.f32 0.0, %v1921
    %v1923 = vpop.f32.mrb[0].mxu0
    %1924 = vmatprep.mubr.f32.mxu0 0.0
    %1925 = vmatmul.mubr.f32.gmra.mrb[0].mxu0 %v1078
    %v1926 = vpop.f32.mrb[0].mxu0
    %v1927 = vadd.f32 0.0, %v1926
    %v1928 = vpop.f32.mrb[0].mxu0
    %1929 = vmatprep.mubr.f32.mxu0 0.0
    %1930 = vmatmul.mubr.f32.gmra.mrb[0].mxu0 %v1083
    %v1931 = vpop.f32.mrb[0].mxu0
    %v1932 = vadd.f32 0.0, %v1931
    %v1933 = vpop.f32.mrb[0].mxu0
    %1934 = vmatprep.mubr.f32.mxu0 0.0
    %1935 = vmatmul.mubr.f32.gmra.mrb[0].mxu0 %v1088
    %v1936 = vpop.f32.mrb[0].mxu0
    %v1937 = vadd.f32 0.0, %v1936
    %v1938 = vpop.f32.mrb[0].mxu0
    %1939 = vmatprep.mubr.f32.mxu0 0.0
    %1940 = vmatmul.mubr.f32.gmra.mrb[0].mxu0 %v1093
    %v1941 = vpop.f32.mrb[0].mxu0
    %v1942 = vadd.f32 0.0, %v1941
    %v1943 = vpop.f32.mrb[0].mxu0
    %1944 = vmatprep.mubr.f32.mxu0 0.0
    %1945 = vmatmul.mubr.f32.gmra.mrb[0].mxu0 %v1098
    %v1946 = vpop.f32.mrb[0].mxu0
    %v1947 = vadd.f32 0.0, %v1946
    %v1948 = vpop.f32.mrb[0].mxu0
    %1949 = vmatprep.mubr.f32.mxu0 0.0
    %1950 = vmatmul.mubr.f32.gmra.mrb[0].mxu0 %v1103
    %v1951 = vpop.f32.mrb[0].mxu0
    %v1952 = vadd.f32 0.0, %v1951
    %v1953 = vpop.f32.mrb[0].mxu0
    %1954 = vmatprep.mubr.f32.mxu0 0.0
    %1955 = vmatmul.mubr.f32.gmra.mrb[0].mxu0 %v1108
    %v1956 = vpop.f32.mrb[0].mxu0
    %v1957 = vadd.f32 0.0, %v1956
    %v1958 = vpop.f32.mrb[0].mxu0
    %1959 = vmatprep.mubr.f32.mxu0 0.0
    %1960 = vmatmul.mubr.f32.gmra.mrb[0].mxu0 %v1113
    %v1961 = vpop.f32.mrb[0].mxu0
    %v1962 = vadd.f32 0.0, %v1961
    %v1963 = vpop.f32.mrb[0].mxu0
    %1964 = vmatprep.mubr.f32.mxu0 0.0
    %1965 = vmatmul.mubr.f32.gmra.mrb[0].mxu0 %v1118
    %v1966 = vpop.f32.mrb[0].mxu0
    %v1967 = vadd.f32 0.0, %v1966
    %v1968 = vpop.f32.mrb[0].mxu0
    %1969 = vmatprep.mubr.f32.mxu0 0.0
    %1970 = vmatmul.mubr.f32.gmra.mrb[0].mxu0 %v1123
    %v1971 = vpop.f32.mrb[0].mxu0
    %v1972 = vadd.f32 0.0, %v1971
    %v1973 = vpop.f32.mrb[0].mxu0
    %1974 = vmatprep.mubr.f32.mxu0 0.0
    %1975 = vmatmul.mubr.f32.gmra.mrb[0].mxu0 %v1128
    %v1976 = vpop.f32.mrb[0].mxu0
    %v1977 = vadd.f32 0.0, %v1976
    %v1978 = vpop.f32.mrb[0].mxu0
    %1979 = vmatprep.mubr.f32.mxu0 0.0
    %1980 = vmatmul.mubr.f32.gmra.mrb[0].mxu0 %v1133
    %v1981 = vpop.f32.mrb[0].mxu0
    %v1982 = vadd.f32 0.0, %v1981
    %v1983 = vpop.f32.mrb[0].mxu0
    %1984 = vmatprep.mubr.f32.mxu0 0.0
    %1985 = vmatmul.mubr.f32.gmra.mrb[0].mxu0 %v1138
    %v1986 = vpop.f32.mrb[0].mxu0
    %v1987 = vadd.f32 0.0, %v1986
    %v1988 = vpop.f32.mrb[0].mxu0
    %1989 = vmatprep.mubr.f32.mxu0 0.0
    %1990 = vmatmul.mubr.f32.gmra.mrb[0].mxu0 %v1143
    %v1991 = vpop.f32.mrb[0].mxu0
    %v1992 = vadd.f32 0.0, %v1991
    %v1993 = vpop.f32.mrb[0].mxu0
    %1994 = vmatprep.mubr.f32.mxu0 0.0
    %1995 = vmatmul.mubr.f32.gmra.mrb[0].mxu0 %v1148
    %v1996 = vpop.f32.mrb[0].mxu0
    %v1997 = vadd.f32 0.0, %v1996
    %v1998 = vpop.f32.mrb[0].mxu0
    %1999 = vmatprep.mubr.f32.mxu0 0.0
    %2000 = vmatmul.mubr.f32.gmra.mrb[0].mxu0 %v1153
    %v2001 = vpop.f32.mrb[0].mxu0
    %v2002 = vadd.f32 0.0, %v2001
    %v2003 = vpop.f32.mrb[0].mxu0
    %2004 = vmatprep.mubr.f32.mxu0 0.0
    %2005 = vmatmul.mubr.f32.gmra.mrb[0].mxu0 %v1158
    %v2006 = vpop.f32.mrb[0].mxu0
    %v2007 = vadd.f32 0.0, %v2006
    %v2008 = vpop.f32.mrb[0].mxu0
    %2009 = vmatprep.mubr.f32.mxu0 0.0
    %2010 = vmatmul.mubr.f32.gmra.mrb[0].mxu0 %v1163
    %v2011 = vpop.f32.mrb[0].mxu0
    %v2012 = vadd.f32 0.0, %v2011
    %v2013 = vpop.f32.mrb[0].mxu0
    %2014 = vmatprep.mubr.f32.mxu0 0.0
    %2015 = vmatmul.mubr.f32.gmra.mrb[0].mxu0 %v1168
    %v2016 = vpop.f32.mrb[0].mxu0
    %v2017 = vadd.f32 0.0, %v2016
    %v2018 = vpop.f32.mrb[0].mxu0
    %2019 = vmatprep.mubr.f32.mxu0 0.0
    %2020 = vmatmul.mubr.f32.gmra.mrb[0].mxu0 %v1173
    %v2021 = vpop.f32.mrb[0].mxu0
    %v2022 = vadd.f32 0.0, %v2021
    %v2023 = vpop.f32.mrb[0].mxu0
    %2024 = vmatprep.mubr.f32.mxu0 0.0
    %2025 = vmatmul.mubr.f32.gmra.mrb[0].mxu0 %v1178
    %v2026 = vpop.f32.mrb[0].mxu0
    %v2027 = vadd.f32 0.0, %v2026
    %v2028 = vpop.f32.mrb[0].mxu0
    %2029 = vmatprep.mubr.f32.mxu0 0.0
    %2030 = vmatmul.mubr.f32.gmra.mrb[0].mxu0 %v1183
    %v2031 = vpop.f32.mrb[0].mxu0
    %v2032 = vadd.f32 0.0, %v2031
    %v2033 = vpop.f32.mrb[0].mxu0
    %2034 = vmatprep.mubr.f32.mxu0 0.0
    %2035 = vmatmul.mubr.f32.gmra.mrb[0].mxu0 %v1188
    %v2036 = vpop.f32.mrb[0].mxu0
    %v2037 = vadd.f32 0.0, %v2036
    %v2038 = vpop.f32.mrb[0].mxu0
    %2039 = vmatprep.mubr.f32.mxu0 0.0
    %2040 = vmatmul.mubr.f32.gmra.mrb[0].mxu0 %v1193
    %v2041 = vpop.f32.mrb[0].mxu0
    %v2042 = vadd.f32 0.0, %v2041
    %v2043 = vpop.f32.mrb[0].mxu0
    %2044 = vmatprep.mubr.f32.mxu0 0.0
    %2045 = vmatmul.mubr.f32.gmra.mrb[0].mxu0 %v1198
    %v2046 = vpop.f32.mrb[0].mxu0
    %v2047 = vadd.f32 0.0, %v2046
    %v2048 = vpop.f32.mrb[0].mxu0
    %2049 = vmatprep.mubr.f32.mxu0 0.0
    %2050 = vmatmul.mubr.f32.gmra.mrb[0].mxu0 %v1203
    %v2051 = vpop.f32.mrb[0].mxu0
    %v2052 = vadd.f32 0.0, %v2051
    %v2053 = vpop.f32.mrb[0].mxu0
    %2054 = vmatprep.mubr.f32.mxu0 0.0
    %2055 = vmatmul.mubr.f32.gmra.mrb[0].mxu0 %v1208
    %v2056 = vpop.f32.mrb[0].mxu0
    %v2057 = vadd.f32 0.0, %v2056
    %v2058 = vpop.f32.mrb[0].mxu0
    %2059 = vmatprep.mubr.f32.mxu0 0.0
    %2060 = vmatmul.mubr.f32.gmra.mrb[0].mxu0 %v1213
    %v2061 = vpop.f32.mrb[0].mxu0
    %v2062 = vadd.f32 0.0, %v2061
    %v2063 = vpop.f32.mrb[0].mxu0
    %2064 = vmatprep.mubr.f32.mxu0 0.0
    %2065 = vmatmul.mubr.f32.gmra.mrb[0].mxu0 %v1218
    %v2066 = vpop.f32.mrb[0].mxu0
    %v2067 = vadd.f32 0.0, %v2066
    %v2068 = vpop.f32.mrb[0].mxu0
    %2069 = vmatprep.mubr.f32.mxu0 0.0
    %2070 = vmatmul.mubr.f32.gmra.mrb[0].mxu0 %v1223
    %v2071 = vpop.f32.mrb[0].mxu0
    %v2072 = vadd.f32 0.0, %v2071
    %v2073 = vpop.f32.mrb[0].mxu0
    %2074 = vmatprep.mubr.f32.mxu0 0.0
    %2075 = vmatmul.mubr.f32.gmra.mrb[0].mxu0 %v1228
    %v2076 = vpop.f32.mrb[0].mxu0
    %v2077 = vadd.f32 0.0, %v2076
    %v2078 = vpop.f32.mrb[0].mxu0
    %2079 = vmatprep.mubr.f32.mxu0 0.0
    %2080 = vmatmul.mubr.f32.gmra.mrb[0].mxu0 %v1233
    %v2081 = vpop.f32.mrb[0].mxu0
    %v2082 = vadd.f32 0.0, %v2081
    %v2083 = vpop.f32.mrb[0].mxu0
    %2084 = vdwg.mxu0
    %vm2085 = vcmask 31744
    %2086 = vst.msk [vmem:[%s4] sm:$0xff] %vm2085, %v1447
    %2087 = vst.msk [vmem:[%s4 + $0x8] sm:$0xff] %vm2085, %v1452
    %2088 = vst.msk [vmem:[%s4 + $0x10] sm:$0xff] %vm2085, %v1457
    %2089 = vst.msk [vmem:[%s4 + $0x18] sm:$0xff] %vm2085, %v1462
    %2090 = vst.msk [vmem:[%s4 + $0x20] sm:$0xff] %vm2085, %v1467
    %2091 = vst.msk [vmem:[%s4 + $0x28] sm:$0xff] %vm2085, %v1472
    %2092 = vst.msk [vmem:[%s4 + $0x30] sm:$0xff] %vm2085, %v1477
    %2093 = vst.msk [vmem:[%s4 + $0x38] sm:$0xff] %vm2085, %v1482
    %2094 = vst.msk [vmem:[%s4 + $0x40] sm:$0xff] %vm2085, %v1487
    %2095 = vst.msk [vmem:[%s4 + $0x48] sm:$0xff] %vm2085, %v1492
    %2096 = vst.msk [vmem:[%s4 + $0x50] sm:$0xff] %vm2085, %v1497
    %2097 = vst.msk [vmem:[%s4 + $0x58] sm:$0xff] %vm2085, %v1502
    %2098 = vst.msk [vmem:[%s4 + $0x60] sm:$0xff] %vm2085, %v1507
    %2099 = vst.msk [vmem:[%s4 + $0x68] sm:$0xff] %vm2085, %v1512
    %2100 = vst.msk [vmem:[%s4 + $0x70] sm:$0xff] %vm2085, %v1517
    %2101 = vst.msk [vmem:[%s4 + $0x78] sm:$0xff] %vm2085, %v1522
    %2102 = vst.msk [vmem:[%s4 + $0x80] sm:$0xff] %vm2085, %v1527
    %2103 = vst.msk [vmem:[%s4 + $0x88] sm:$0xff] %vm2085, %v1532
    %2104 = vst.msk [vmem:[%s4 + $0x90] sm:$0xff] %vm2085, %v1537
    %2105 = vst.msk [vmem:[%s4 + $0x98] sm:$0xff] %vm2085, %v1542
    %2106 = vst.msk [vmem:[%s4 + $0xa0] sm:$0xff] %vm2085, %v1547
    %2107 = vst.msk [vmem:[%s4 + $0xa8] sm:$0xff] %vm2085, %v1552
    %2108 = vst.msk [vmem:[%s4 + $0xb0] sm:$0xff] %vm2085, %v1557
    %2109 = vst.msk [vmem:[%s4 + $0xb8] sm:$0xff] %vm2085, %v1562
    %2110 = vst.msk [vmem:[%s4 + $0xc0] sm:$0xff] %vm2085, %v1567
    %2111 = vst.msk [vmem:[%s4 + $0xc8] sm:$0xff] %vm2085, %v1572
    %2112 = vst.msk [vmem:[%s4 + $0xd0] sm:$0xff] %vm2085, %v1577
    %2113 = vst.msk [vmem:[%s4 + $0xd8] sm:$0xff] %vm2085, %v1582
    %2114 = vst.msk [vmem:[%s4 + $0xe0] sm:$0xff] %vm2085, %v1587
    %2115 = vst.msk [vmem:[%s4 + $0xe8] sm:$0xff] %vm2085, %v1592
    %2116 = vst.msk [vmem:[%s4 + $0xf0] sm:$0xff] %vm2085, %v1597
    %2117 = vst.msk [vmem:[%s4 + $0xf8] sm:$0xff] %vm2085, %v1602
    %2118 = vst.msk [vmem:[%s4 + $0x100] sm:$0xff] %vm2085, %v1607
    %2119 = vst.msk [vmem:[%s4 + $0x108] sm:$0xff] %vm2085, %v1612
    %2120 = vst.msk [vmem:[%s4 + $0x110] sm:$0xff] %vm2085, %v1617
    %2121 = vst.msk [vmem:[%s4 + $0x118] sm:$0xff] %vm2085, %v1622
    %2122 = vst.msk [vmem:[%s4 + $0x120] sm:$0xff] %vm2085, %v1627
    %2123 = vst.msk [vmem:[%s4 + $0x128] sm:$0xff] %vm2085, %v1632
    %2124 = vst.msk [vmem:[%s4 + $0x130] sm:$0xff] %vm2085, %v1637
    %2125 = vst.msk [vmem:[%s4 + $0x138] sm:$0xff] %vm2085, %v1642
    %2126 = vst.msk [vmem:[%s4 + $0x140] sm:$0xff] %vm2085, %v1647
    %2127 = vst.msk [vmem:[%s4 + $0x148] sm:$0xff] %vm2085, %v1652
    %2128 = vst.msk [vmem:[%s4 + $0x150] sm:$0xff] %vm2085, %v1657
    %2129 = vst.msk [vmem:[%s4 + $0x158] sm:$0xff] %vm2085, %v1662
    %2130 = vst.msk [vmem:[%s4 + $0x160] sm:$0xff] %vm2085, %v1667
    %2131 = vst.msk [vmem:[%s4 + $0x168] sm:$0xff] %vm2085, %v1672
    %2132 = vst.msk [vmem:[%s4 + $0x170] sm:$0xff] %vm2085, %v1677
    %2133 = vst.msk [vmem:[%s4 + $0x178] sm:$0xff] %vm2085, %v1682
    %2134 = vst.msk [vmem:[%s4 + $0x180] sm:$0xff] %vm2085, %v1687
    %2135 = vst.msk [vmem:[%s4 + $0x188] sm:$0xff] %vm2085, %v1692
    %2136 = vst.msk [vmem:[%s4 + $0x190] sm:$0xff] %vm2085, %v1697
    %2137 = vst.msk [vmem:[%s4 + $0x198] sm:$0xff] %vm2085, %v1702
    %2138 = vst.msk [vmem:[%s4 + $0x1a0] sm:$0xff] %vm2085, %v1707
    %2139 = vst.msk [vmem:[%s4 + $0x1a8] sm:$0xff] %vm2085, %v1712
    %2140 = vst.msk [vmem:[%s4 + $0x1b0] sm:$0xff] %vm2085, %v1717
    %2141 = vst.msk [vmem:[%s4 + $0x1b8] sm:$0xff] %vm2085, %v1722
    %2142 = vst.msk [vmem:[%s4 + $0x1c0] sm:$0xff] %vm2085, %v1727
    %2143 = vst.msk [vmem:[%s4 + $0x1c8] sm:$0xff] %vm2085, %v1732
    %2144 = vst.msk [vmem:[%s4 + $0x1d0] sm:$0xff] %vm2085, %v1737
    %2145 = vst.msk [vmem:[%s4 + $0x1d8] sm:$0xff] %vm2085, %v1742
    %2146 = vst.msk [vmem:[%s4 + $0x1e0] sm:$0xff] %vm2085, %v1747
    %2147 = vst.msk [vmem:[%s4 + $0x1e8] sm:$0xff] %vm2085, %v1752
    %2148 = vst.msk [vmem:[%s4 + $0x1f0] sm:$0xff] %vm2085, %v1757
    %2149 = vst.msk [vmem:[%s4 + $0x1f8] sm:$0xff] %vm2085, %v1762
    %2150 = vst.msk [vmem:[%s4 + $0x200] sm:$0xff] %vm2085, %v1767
    %2151 = vst.msk [vmem:[%s4 + $0x208] sm:$0xff] %vm2085, %v1772
    %2152 = vst.msk [vmem:[%s4 + $0x210] sm:$0xff] %vm2085, %v1777
    %2153 = vst.msk [vmem:[%s4 + $0x218] sm:$0xff] %vm2085, %v1782
    %2154 = vst.msk [vmem:[%s4 + $0x220] sm:$0xff] %vm2085, %v1787
    %2155 = vst.msk [vmem:[%s4 + $0x228] sm:$0xff] %vm2085, %v1792
    %2156 = vst.msk [vmem:[%s4 + $0x230] sm:$0xff] %vm2085, %v1797
    %2157 = vst.msk [vmem:[%s4 + $0x238] sm:$0xff] %vm2085, %v1802
    %2158 = vst.msk [vmem:[%s4 + $0x240] sm:$0xff] %vm2085, %v1807
    %2159 = vst.msk [vmem:[%s4 + $0x248] sm:$0xff] %vm2085, %v1812
    %2160 = vst.msk [vmem:[%s4 + $0x250] sm:$0xff] %vm2085, %v1817
    %2161 = vst.msk [vmem:[%s4 + $0x258] sm:$0xff] %vm2085, %v1822
    %2162 = vst.msk [vmem:[%s4 + $0x260] sm:$0xff] %vm2085, %v1827
    %2163 = vst.msk [vmem:[%s4 + $0x268] sm:$0xff] %vm2085, %v1832
    %2164 = vst.msk [vmem:[%s4 + $0x270] sm:$0xff] %vm2085, %v1837
    %2165 = vst.msk [vmem:[%s4 + $0x278] sm:$0xff] %vm2085, %v1842
    %2166 = vst.msk [vmem:[%s4 + $0x280] sm:$0xff] %vm2085, %v1847
    %2167 = vst.msk [vmem:[%s4 + $0x288] sm:$0xff] %vm2085, %v1852
    %2168 = vst.msk [vmem:[%s4 + $0x290] sm:$0xff] %vm2085, %v1857
    %2169 = vst.msk [vmem:[%s4 + $0x298] sm:$0xff] %vm2085, %v1862
    %2170 = vst.msk [vmem:[%s4 + $0x2a0] sm:$0xff] %vm2085, %v1867
    %2171 = vst.msk [vmem:[%s4 + $0x2a8] sm:$0xff] %vm2085, %v1872
    %2172 = vst.msk [vmem:[%s4 + $0x2b0] sm:$0xff] %vm2085, %v1877
    %2173 = vst.msk [vmem:[%s4 + $0x2b8] sm:$0xff] %vm2085, %v1882
    %2174 = vst.msk [vmem:[%s4 + $0x2c0] sm:$0xff] %vm2085, %v1887
    %2175 = vst.msk [vmem:[%s4 + $0x2c8] sm:$0xff] %vm2085, %v1892
    %2176 = vst.msk [vmem:[%s4 + $0x2d0] sm:$0xff] %vm2085, %v1897
    %2177 = vst.msk [vmem:[%s4 + $0x2d8] sm:$0xff] %vm2085, %v1902
    %2178 = vst.msk [vmem:[%s4 + $0x2e0] sm:$0xff] %vm2085, %v1907
    %2179 = vst.msk [vmem:[%s4 + $0x2e8] sm:$0xff] %vm2085, %v1912
    %2180 = vst.msk [vmem:[%s4 + $0x2f0] sm:$0xff] %vm2085, %v1917
    %2181 = vst.msk [vmem:[%s4 + $0x2f8] sm:$0xff] %vm2085, %v1922
    %2182 = vst.msk [vmem:[%s4 + $0x300] sm:$0xff] %vm2085, %v1927
    %2183 = vst.msk [vmem:[%s4 + $0x308] sm:$0xff] %vm2085, %v1932
    %2184 = vst.msk [vmem:[%s4 + $0x310] sm:$0xff] %vm2085, %v1937
    %2185 = vst.msk [vmem:[%s4 + $0x318] sm:$0xff] %vm2085, %v1942
    %2186 = vst.msk [vmem:[%s4 + $0x320] sm:$0xff] %vm2085, %v1947
    %2187 = vst.msk [vmem:[%s4 + $0x328] sm:$0xff] %vm2085, %v1952
    %2188 = vst.msk [vmem:[%s4 + $0x330] sm:$0xff] %vm2085, %v1957
    %2189 = vst.msk [vmem:[%s4 + $0x338] sm:$0xff] %vm2085, %v1962
    %2190 = vst.msk [vmem:[%s4 + $0x340] sm:$0xff] %vm2085, %v1967
    %2191 = vst.msk [vmem:[%s4 + $0x348] sm:$0xff] %vm2085, %v1972
    %2192 = vst.msk [vmem:[%s4 + $0x350] sm:$0xff] %vm2085, %v1977
    %2193 = vst.msk [vmem:[%s4 + $0x358] sm:$0xff] %vm2085, %v1982
    %2194 = vst.msk [vmem:[%s4 + $0x360] sm:$0xff] %vm2085, %v1987
    %2195 = vst.msk [vmem:[%s4 + $0x368] sm:$0xff] %vm2085, %v1992
    %2196 = vst.msk [vmem:[%s4 + $0x370] sm:$0xff] %vm2085, %v1997
    %2197 = vst.msk [vmem:[%s4 + $0x378] sm:$0xff] %vm2085, %v2002
    %2198 = vst.msk [vmem:[%s4 + $0x380] sm:$0xff] %vm2085, %v2007
    %2199 = vst.msk [vmem:[%s4 + $0x388] sm:$0xff] %vm2085, %v2012
    %2200 = vst.msk [vmem:[%s4 + $0x390] sm:$0xff] %vm2085, %v2017
    %2201 = vst.msk [vmem:[%s4 + $0x398] sm:$0xff] %vm2085, %v2022
    %2202 = vst.msk [vmem:[%s4 + $0x3a0] sm:$0xff] %vm2085, %v2027
    %2203 = vst.msk [vmem:[%s4 + $0x3a8] sm:$0xff] %vm2085, %v2032
    %2204 = vst.msk [vmem:[%s4 + $0x3b0] sm:$0xff] %vm2085, %v2037
    %2205 = vst.msk [vmem:[%s4 + $0x3b8] sm:$0xff] %vm2085, %v2042
    %2206 = vst.msk [vmem:[%s4 + $0x3c0] sm:$0xff] %vm2085, %v2047
    %2207 = vst.msk [vmem:[%s4 + $0x3c8] sm:$0xff] %vm2085, %v2052
    %2208 = vst.msk [vmem:[%s4 + $0x3d0] sm:$0xff] %vm2085, %v2057
    %2209 = vst.msk [vmem:[%s4 + $0x3d8] sm:$0xff] %vm2085, %v2062
    %2210 = vst.msk [vmem:[%s4 + $0x3e0] sm:$0xff] %vm2085, %v2067
    %2211 = vst.msk [vmem:[%s4 + $0x3e8] sm:$0xff] %vm2085, %v2072
    %2212 = vst.msk [vmem:[%s4 + $0x3f0] sm:$0xff] %vm2085, %v2077
    %2213 = vst.msk [vmem:[%s4 + $0x3f8] sm:$0xff] %vm2085, %v2082
    // Predicated region
    $region14: #{tpu_custom_call.1} parent=1 // pred_check
      _
    $region15: #{tpu_custom_call.1} parent=1 // pred_check_branch
      %2215 = sbr.rel (0) target = $region17
    $region16: #{tpu_custom_call.1} parent=1 // pred_region
      %s2217 = ssub.s32 16384, 16384
      %2218 = vsyncadd [#allocation3], %s2217
      %s2219 = sshll.u32 [#allocation2], 4
      %s2220 = int_to_ptr.vmem [resolvable:$true] %s2219
      %2225 = dma.vmem_to_hbm [thread:$0]  %s2220, 16384, %s3, [#allocation3], 128, 128, 8
    $region17: #{tpu_custom_call.1} parent=1 // pred_fallthru
      _
    // Predicated region
    $region18: #{tpu_custom_call.1} parent=1 // pred_check
      _
    $region19: #{tpu_custom_call.1} parent=1 // pred_check_branch
      %2227 = sbr.rel (0) target = $region21
    $region20: #{tpu_custom_call.1} parent=1 // pred_region
      _
    $region21: #{tpu_custom_call.1} parent=1 // pred_fallthru
      _
    // Predicated region
    $region22: #{tpu_custom_call.1} parent=1 // pred_check
      _
    $region23: #{tpu_custom_call.1} parent=1 // pred_check_branch
      %2229 = sbr.rel (0) target = $region25
    $region24: #{tpu_custom_call.1} parent=1 // pred_region
      %2230 = dma.done [#allocation3], 16384
    $region25: #{tpu_custom_call.1} parent=1 // pred_fallthru
      _
    // Predicated region
    $region26: #{tpu_custom_call.1} parent=1 // pred_check
      _
    $region27: #{tpu_custom_call.1} parent=1 // pred_check_branch
      %2232 = sbr.rel (0) target = $region29
    $region28: #{tpu_custom_call.1} parent=1 // pred_region
      _
    $region29: #{tpu_custom_call.1} parent=1 // pred_fallthru
      _
    %2233 = vsyncpa [#allocation3], 1

</llo_original>
